<compile_context>
chip_gen: v6e
topology: v6e:2x2x1
jax: 0.10.0
libtpu: 0.0.40
codegen_flags: <defaults>
</compile_context>

<pallas_src>
import functools

import numpy as np
import jax
import jax.numpy as jnp
from jax.experimental import pallas as pl
from jax.experimental.pallas import tpu as pltpu


def _psa_kernel(x_ref, pemask_ref, w1_ref, b1_ref, wqkv_ref, bqkv_ref, dw_ref,
                bpe_ref, wproj_ref, bproj_ref, wf1_ref, bf1_ref, wf2_ref,
                bf2_ref, w2_ref, b2_ref, o_ref, *,
                H, W, c, num_heads, key_dim, head_dim, scale):
    f32, bf16 = jnp.float32, jnp.bfloat16
    N = H * W
    nh_kd = num_heads * key_dim
    x = x_ref[0]                                                    # (N, c1) f32

    # ---- cv1: 1x1 conv (+folded BN) + SiLU, then channel split --------------
    y = jnp.dot(x.astype(bf16), w1_ref[...], preferred_element_type=f32) + b1_ref[...]
    y = y * jax.nn.sigmoid(y)                                       # SiLU (f32 epilogue)
    a = y[:, :c]                                                    # (N, c)
    b = y[:, c:]                                                    # (N, c)

    # ---- Attention(b) --------------------------------------------------------
    # wqkv columns are pre-permuted to [Q_all | K_all | V_all] (head-major inside
    # each group): per-head q/k and the full V image are plain slices, so there is
    # no jnp.concatenate / lane relayout anywhere in the attention path.
    qkv = jnp.dot(b.astype(bf16), wqkv_ref[...], preferred_element_type=f32) + bqkv_ref[...]
    v_all = qkv[:, 2 * nh_kd:]                                      # (N, c) head-major

    # pe: depthwise 3x3 conv (+folded BN) on the v image, computed directly in the
    # flat (N, c) layout with XLU rolls + precomputed border masks: no VMEM scratch
    # (no memset), no unaligned sublane taps, no (N,c)<->(H,W,c) reshapes.
    masks = pemask_ref[...]                                         # (N, 4) f32
    m_top, m_bot = masks[:, 0:1], masks[:, 1:2]                     # y-1 / y+1 in range
    m_left, m_right = masks[:, 2:3], masks[:, 3:4]                  # x-1 / x+1 in range
    dw = dw_ref[...]                                                # (9, c) f32
    v_l = pltpu.roll(v_all, 1, axis=0) * m_left                     # reads v[.., x-1]
    v_r = pltpu.roll(v_all, N - 1, axis=0) * m_right                # reads v[.., x+1]
    vx = (v_l, v_all, v_r)                                          # dx = -1, 0, +1
    pe = jnp.zeros((N, c), f32)
    for dy in (-1, 0, 1):
        for dxi in range(3):
            img = vx[dxi]
            if dy == -1:
                img = pltpu.roll(img, W, axis=0) * m_top            # reads v[y-1, ..]
            elif dy == 1:
                img = pltpu.roll(img, N - W, axis=0) * m_bot        # reads v[y+1, ..]
            row = 3 * (dy + 1) + dxi
            pe = pe + img * dw[row:row + 1, :]                      # VPU FMA per tap
    pe = pe + bpe_ref[...]

    # Per-head scores/softmax/AV; proj folded in per head via row-blocks of wproj:
    #   proj(att ++ pe) == sum_h (att_h + pe_h) @ wproj[h*hd:(h+1)*hd, :]   (no concat)
    # TODO(synk): at production channel counts (num_heads>=4, N>=400) batch the
    # per-head dots as one 3-D dot_general and tile KV flash-style for v7x's 64 MiB VMEM.
    proj_acc = None
    for h in range(num_heads):                                      # static unroll
        q = qkv[:, h * key_dim:(h + 1) * key_dim]                   # (N, kd)
        kk = qkv[:, nh_kd + h * key_dim:nh_kd + (h + 1) * key_dim]  # (N, kd)
        v_h = v_all[:, h * head_dim:(h + 1) * head_dim]             # (N, hd)
        s = jax.lax.dot_general(q.astype(bf16), kk.astype(bf16),
                                (((1,), (1,)), ((), ())),
                                preferred_element_type=f32) * scale
        s = s - jnp.max(s, axis=-1, keepdims=True)
        p = jnp.exp(s)
        p = p * pl.reciprocal(jnp.sum(p, axis=-1, keepdims=True), approx=True)
        att_h = jnp.dot(p.astype(bf16), v_h.astype(bf16), preferred_element_type=f32)
        xa_h = att_h + pe[:, h * head_dim:(h + 1) * head_dim]
        wp_h = wproj_ref[pl.ds(h * head_dim, head_dim), :]          # (hd, c) bf16
        t = jnp.dot(xa_h.astype(bf16), wp_h, preferred_element_type=f32)
        proj_acc = t if proj_acc is None else proj_acc + t
    b = b + proj_acc + bproj_ref[...]                               # b = b + attn(b)

    # ---- FFN -----------------------------------------------------------------
    t = jnp.dot(b.astype(bf16), wf1_ref[...], preferred_element_type=f32) + bf1_ref[...]
    t = t * jax.nn.sigmoid(t)
    b = b + (jnp.dot(t.astype(bf16), wf2_ref[...], preferred_element_type=f32) + bf2_ref[...])

    # ---- cv2 on concat(a, b): split the weight rows instead of concatenating --
    out = (jnp.dot(a.astype(bf16), w2_ref[:c, :], preferred_element_type=f32)
           + jnp.dot(b.astype(bf16), w2_ref[c:, :], preferred_element_type=f32)
           + b2_ref[...])
    out = out * jax.nn.sigmoid(out)
    o_ref[0] = out.astype(o_ref.dtype)


def psa_forward(x_nchw, params, *, c, num_heads, key_dim, head_dim):
    """PSA forward.  x_nchw: (B, C1, H, W) like PyTorch; returns NCHW."""
    B, C1, H, W = x_nchw.shape
    N = H * W
    # NCHW -> (B, H*W, C1): lane-dense channels-last for the kernel.
    # TODO(synk): carry NHWC through the surrounding network to drop these two
    # full-activation HBM transpose passes at real sizes.
    x = jnp.transpose(x_nchw, (0, 2, 3, 1)).reshape(B, N, C1)

    # Regroup qkv output channels: PyTorch per-head [q|k|v] interleave
    # -> [all-head Q | all-head K | all-head V] so the kernel never concatenates.
    per_head = 2 * key_dim + head_dim
    groups = ((0, key_dim), (key_dim, key_dim), (2 * key_dim, head_dim))
    perm = np.concatenate([
        np.concatenate([np.arange(h * per_head + off, h * per_head + off + sz)
                        for h in range(num_heads)])
        for off, sz in groups])
    wqkv_g = params["wqkv"][:, perm]
    bqkv_g = params["bqkv"][:, perm]

    # Matmul weights in bf16 (MXU-native on v5e/v6e/v7x); biases + depthwise taps
    # stay f32 (elementwise epilogues run in f32, esp. important on v5e).
    bf16 = jnp.bfloat16
    weights = [
        params["w1"].astype(bf16), params["b1"],
        wqkv_g.astype(bf16), bqkv_g,
        params["dw"], params["bpe"],
        params["wproj"].astype(bf16), params["bproj"],
        params["wf1"].astype(bf16), params["bf1"],
        params["wf2"].astype(bf16), params["bf2"],
        params["w2"].astype(bf16), params["b2"],
    ]

    # Border-validity masks for the depthwise 3x3 taps (host-precomputed constants).
    ys, xs = np.divmod(np.arange(N), W)
    pemask = jnp.asarray(np.stack([ys >= 1, ys <= H - 2, xs >= 1, xs <= W - 2],
                                  axis=1).astype(np.float32))       # (N, 4)
    consts = [pemask] + weights

    def const_spec(arr):                       # grid-invariant full-array block
        nd = arr.ndim
        return pl.BlockSpec(arr.shape, lambda n, _nd=nd: (0,) * _nd)
    # TODO(synk): at real channel counts single-buffer these grid-invariant inputs
    # (pipeline_mode=pl.Buffered(1)) to halve resident weight VMEM.

    kernel = functools.partial(
        _psa_kernel, H=H, W=W, c=c, num_heads=num_heads,
        key_dim=key_dim, head_dim=head_dim, scale=float(key_dim) ** -0.5)

    out = pl.pallas_call(
        kernel,
        out_shape=jax.ShapeDtypeStruct((B, N, C1), x_nchw.dtype),
        grid=(B,),
        in_specs=[pl.BlockSpec((1, N, C1), lambda n: (n, 0, 0))]
                 + [const_spec(w) for w in consts],
        out_specs=pl.BlockSpec((1, N, C1), lambda n: (n, 0, 0)),
        compiler_params=pltpu.CompilerParams(
            dimension_semantics=("parallel",),       # batch axis -> 2 TCs on v7x
            vmem_limit_bytes=32 * 1024 * 1024),
    )(x, *consts)
    # TODO(synk): for B=1 on v7x add a second parallel grid axis (query-row tiles +
    # flash-style KV loop) so both TensorCores stay busy and NxN scores tile.
    return jnp.transpose(out.reshape(B, H, W, C1), (0, 3, 1, 2))


# ----------------------------- parameter helpers ------------------------------
def _fold_bn(gamma, beta, mean, var, eps=1e-3):
    scale = gamma / jnp.sqrt(var + eps)
    return scale, beta - mean * scale


def _rand_conv1x1(key, cin, cout):
    """Conv2d(cin,cout,1,bias=False) + BatchNorm2d(cout) folded -> (W (cin,cout), b (1,cout))."""
    kw, kg, kb, km, kv = jax.random.split(key, 5)
    w = 0.1 * jax.random.normal(kw, (cout, cin), jnp.float32)
    gamma = 1.0 + 0.1 * jax.random.normal(kg, (cout,), jnp.float32)
    beta = 0.1 * jax.random.normal(kb, (cout,), jnp.float32)
    mean = 0.1 * jax.random.normal(km, (cout,), jnp.float32)
    var = jax.random.uniform(kv, (cout,), jnp.float32, 0.5, 1.5)
    scale, b_eff = _fold_bn(gamma, beta, mean, var)
    return (w * scale[:, None]).T, b_eff.reshape(1, cout)


def _rand_dw3x3(key, ch):
    """Conv2d(ch,ch,3,groups=ch,bias=False) + BatchNorm2d(ch) folded -> (W (3,3,ch), b (1,ch))."""
    kw, kg, kb, km, kv = jax.random.split(key, 5)
    w = 0.1 * jax.random.normal(kw, (ch, 1, 3, 3), jnp.float32)
    gamma = 1.0 + 0.1 * jax.random.normal(kg, (ch,), jnp.float32)
    beta = 0.1 * jax.random.normal(kb, (ch,), jnp.float32)
    mean = 0.1 * jax.random.normal(km, (ch,), jnp.float32)
    var = jax.random.uniform(kv, (ch,), jnp.float32, 0.5, 1.5)
    scale, b_eff = _fold_bn(gamma, beta, mean, var)
    w_eff = jnp.transpose(w[:, 0] * scale[:, None, None], (1, 2, 0))   # (3,3,ch)
    return w_eff, b_eff.reshape(1, ch)


# ------------------------------ pure-JAX reference ----------------------------
def _ref_psa(x_nchw, P, dw_hwio, *, c, num_heads, key_dim, head_dim):
    B, C1, H, W = x_nchw.shape
    N = H * W
    silu = lambda z: z * jax.nn.sigmoid(z)
    x = jnp.transpose(x_nchw, (0, 2, 3, 1)).reshape(B, N, C1)
    y = silu(x @ P["w1"] + P["b1"])
    a, b = y[..., :c], y[..., c:]
    qkv = (b @ P["wqkv"] + P["bqkv"]).reshape(B, N, num_heads, 2 * key_dim + head_dim)
    q, k, v = (qkv[..., :key_dim], qkv[..., key_dim:2 * key_dim], qkv[..., 2 * key_dim:])
    attn = jax.nn.softmax(jnp.einsum("bnhk,bmhk->bhnm", q, k) * key_dim ** -0.5, axis=-1)
    av = jnp.einsum("bhnm,bmhd->bnhd", attn, v).reshape(B, N, num_heads * head_dim)
    v_img = v.reshape(B, H, W, num_heads * head_dim)
    pe = jax.lax.conv_general_dilated(
        v_img, dw_hwio, (1, 1), "SAME",
        dimension_numbers=("NHWC", "HWIO", "NHWC"),
        feature_group_count=c).reshape(B, N, c) + P["bpe"]
    b = b + ((av + pe) @ P["wproj"] + P["bproj"])
    b = b + (silu(b @ P["wf1"] + P["bf1"]) @ P["wf2"] + P["bf2"])
    out = silu(jnp.concatenate([a, b], axis=-1) @ P["w2"] + P["b2"])
    return jnp.transpose(out.reshape(B, H, W, C1), (0, 3, 1, 2))


if __name__ == "__main__":
    # PSA(c1=128, c2=128, e=0.5): the smallest config the module allows, since
    # Attention uses num_heads = c // 64 (so c must be >= 64, i.e. c1 >= 128).
    c1 = 128
    e = 0.5
    c = int(c1 * e)                      # 64 hidden channels
    num_heads = c // 64                  # 1
    head_dim = c // num_heads            # 64
    key_dim = head_dim // 2              # 32   (attn_ratio = 0.5)
    h_qkv = c + 2 * key_dim * num_heads  # 128
    B, H, W = 2, 8, 8

    root = jax.random.PRNGKey(0)
    kx, k1, k2, k3, k4, k5, k6, k7 = jax.random.split(root, 8)
    x_nchw = jax.random.normal(kx, (B, c1, H, W), jnp.float32)

    w1, b1 = _rand_conv1x1(k1, c1, 2 * c)        # cv1
    wqkv, bqkv = _rand_conv1x1(k2, c, h_qkv)     # attn.qkv (act=False)
    dw, bpe = _rand_dw3x3(k3, c)                 # attn.pe  (depthwise 3x3, act=False)
    wproj, bproj = _rand_conv1x1(k4, c, c)       # attn.proj (act=False)
    wf1, bf1 = _rand_conv1x1(k5, c, 2 * c)       # ffn[0]
    wf2, bf2 = _rand_conv1x1(k6, 2 * c, c)       # ffn[1]   (act=False)
    w2, b2 = _rand_conv1x1(k7, 2 * c, c1)        # cv2

    params = dict(w1=w1, b1=b1, wqkv=wqkv, bqkv=bqkv, dw=dw.reshape(9, c),
                  bpe=bpe, wproj=wproj, bproj=bproj, wf1=wf1, bf1=bf1,
                  wf2=wf2, bf2=bf2, w2=w2, b2=b2)

    out = psa_forward(x_nchw, params, c=c, num_heads=num_heads,
                      key_dim=key_dim, head_dim=head_dim)
    out = jax.block_until_ready(out)

    with jax.default_matmul_precision("highest"):
        ref = _ref_psa(x_nchw, params, dw.reshape(3, 3, 1, c), c=c,
                       num_heads=num_heads, key_dim=key_dim, head_dim=head_dim)
        ref = jax.block_until_ready(ref)

    assert out.shape == (B, c1, H, W), out.shape
    max_err = float(jnp.max(jnp.abs(out - ref)))
    rel_err = float(jnp.linalg.norm(out - ref) / jnp.linalg.norm(ref))
    # bf16 MXU operands vs. an all-f32 "highest"-precision reference.
    assert max_err < 0.3 and rel_err < 0.03, (max_err, rel_err)
    print("KERNEL_OK")
</pallas_src>

<mosaic_0001>
module attributes {stable_mosaic.version = 11 : i64} {
  func.func @_psa_kernel(%arg0: i32, %arg1: memref<1x64x128xf32, #tpu.memory_space<vmem>>, %arg2: memref<64x4xf32, #tpu.memory_space<vmem>>, %arg3: memref<128x128xbf16, #tpu.memory_space<vmem>>, %arg4: memref<1x128xf32, #tpu.memory_space<vmem>>, %arg5: memref<64x128xbf16, #tpu.memory_space<vmem>>, %arg6: memref<1x128xf32, #tpu.memory_space<vmem>>, %arg7: memref<9x64xf32, #tpu.memory_space<vmem>>, %arg8: memref<1x64xf32, #tpu.memory_space<vmem>>, %arg9: memref<64x64xbf16, #tpu.memory_space<vmem>>, %arg10: memref<1x64xf32, #tpu.memory_space<vmem>>, %arg11: memref<64x128xbf16, #tpu.memory_space<vmem>>, %arg12: memref<1x128xf32, #tpu.memory_space<vmem>>, %arg13: memref<128x64xbf16, #tpu.memory_space<vmem>>, %arg14: memref<1x64xf32, #tpu.memory_space<vmem>>, %arg15: memref<128x128xbf16, #tpu.memory_space<vmem>>, %arg16: memref<1x128xf32, #tpu.memory_space<vmem>>, %arg17: memref<1x64x128xf32, #tpu.memory_space<vmem>>) attributes {dimension_semantics = [#tpu.dimension_semantics<parallel>], iteration_bounds = array<i64: 2>, scalar_prefetch = 0 : i64, scratch_operands = 0 : i64, tpu.core_type = #tpu.core_type<tc>, window_params = [{transform_indices = @transform_0, window_bounds = array<i64: 1, 64, 128>}, {pipeline_mode = #tpu.pipeline_mode<synchronous>, transform_indices = @transform_1, window_bounds = array<i64: 64, 4>}, {pipeline_mode = #tpu.pipeline_mode<synchronous>, transform_indices = @transform_2, window_bounds = array<i64: 128, 128>}, {pipeline_mode = #tpu.pipeline_mode<synchronous>, transform_indices = @transform_3, window_bounds = array<i64: 1, 128>}, {pipeline_mode = #tpu.pipeline_mode<synchronous>, transform_indices = @transform_4, window_bounds = array<i64: 64, 128>}, {pipeline_mode = #tpu.pipeline_mode<synchronous>, transform_indices = @transform_5, window_bounds = array<i64: 1, 128>}, {pipeline_mode = #tpu.pipeline_mode<synchronous>, transform_indices = @transform_6, window_bounds = array<i64: 9, 64>}, {pipeline_mode = #tpu.pipeline_mode<synchronous>, transform_indices = @transform_7, window_bounds = array<i64: 1, 64>}, {pipeline_mode = #tpu.pipeline_mode<synchronous>, transform_indices = @transform_8, window_bounds = array<i64: 64, 64>}, {pipeline_mode = #tpu.pipeline_mode<synchronous>, transform_indices = @transform_9, window_bounds = array<i64: 1, 64>}, {pipeline_mode = #tpu.pipeline_mode<synchronous>, transform_indices = @transform_10, window_bounds = array<i64: 64, 128>}, {pipeline_mode = #tpu.pipeline_mode<synchronous>, transform_indices = @transform_11, window_bounds = array<i64: 1, 128>}, {pipeline_mode = #tpu.pipeline_mode<synchronous>, transform_indices = @transform_12, window_bounds = array<i64: 128, 64>}, {pipeline_mode = #tpu.pipeline_mode<synchronous>, transform_indices = @transform_13, window_bounds = array<i64: 1, 64>}, {pipeline_mode = #tpu.pipeline_mode<synchronous>, transform_indices = @transform_14, window_bounds = array<i64: 128, 128>}, {pipeline_mode = #tpu.pipeline_mode<synchronous>, transform_indices = @transform_15, window_bounds = array<i64: 1, 128>}, {transform_indices = @transform_16, window_bounds = array<i64: 1, 64, 128>}]} {
    %c0 = arith.constant 0 : index
    %c0_0 = arith.constant 0 : index
    %c0_1 = arith.constant 0 : index
    %0 = vector.load %arg1[%c0, %c0_0, %c0_1] : memref<1x64x128xf32, #tpu.memory_space<vmem>>, vector<1x64x128xf32>
    %1 = vector.shape_cast %0 : vector<1x64x128xf32> to vector<64x128xf32>
    %2 = arith.truncf %1 : vector<64x128xf32> to vector<64x128xbf16>
    %c0_2 = arith.constant 0 : index
    %c0_3 = arith.constant 0 : index
    %3 = vector.load %arg3[%c0_2, %c0_3] : memref<128x128xbf16, #tpu.memory_space<vmem>>, vector<128x128xbf16>
    %cst = arith.constant dense<0.000000e+00> : vector<64x128xf32>
    %4 = tpu.matmul %2, %3, %cst {dimension_numbers = #tpu.dot_dimension_numbers<[1], [0], [0], [1], [0, 0, 1, 1], [], []>} : vector<64x128xbf16>, vector<128x128xbf16>, vector<64x128xf32> -> vector<64x128xf32>
    %c0_4 = arith.constant 0 : index
    %c0_5 = arith.constant 0 : index
    %5 = vector.load %arg4[%c0_4, %c0_5] : memref<1x128xf32, #tpu.memory_space<vmem>>, vector<1x128xf32>
    %6 = vector.broadcast %5 : vector<1x128xf32> to vector<64x128xf32>
    %7 = arith.addf %4, %6 : vector<64x128xf32>
    %8 = arith.negf %7 : vector<64x128xf32>
    %9 = math.exp %8 : vector<64x128xf32>
    %cst_6 = arith.constant 1.000000e+00 : f32
    %10 = vector.broadcast %cst_6 : f32 to vector<64x128xf32>
    %11 = arith.addf %10, %9 : vector<64x128xf32>
    %12 = arith.divf %10, %11 : vector<64x128xf32>
    %13 = arith.mulf %7, %12 : vector<64x128xf32>
    %14 = vector.extract_strided_slice %13 {offsets = [0, 0], sizes = [64, 64], strides = [1, 1]} : vector<64x128xf32> to vector<64x64xf32>
    %15 = vector.extract_strided_slice %13 {offsets = [0, 64], sizes = [64, 64], strides = [1, 1]} : vector<64x128xf32> to vector<64x64xf32>
    %16 = arith.truncf %15 : vector<64x64xf32> to vector<64x64xbf16>
    %c0_7 = arith.constant 0 : index
    %c0_8 = arith.constant 0 : index
    %17 = vector.load %arg5[%c0_7, %c0_8] : memref<64x128xbf16, #tpu.memory_space<vmem>>, vector<64x128xbf16>
    %cst_9 = arith.constant dense<0.000000e+00> : vector<64x128xf32>
    %18 = tpu.matmul %16, %17, %cst_9 {dimension_numbers = #tpu.dot_dimension_numbers<[1], [0], [0], [1], [0, 0, 1, 1], [], []>} : vector<64x64xbf16>, vector<64x128xbf16>, vector<64x128xf32> -> vector<64x128xf32>
    %c0_10 = arith.constant 0 : index
    %c0_11 = arith.constant 0 : index
    %19 = vector.load %arg6[%c0_10, %c0_11] : memref<1x128xf32, #tpu.memory_space<vmem>>, vector<1x128xf32>
    %20 = vector.broadcast %19 : vector<1x128xf32> to vector<64x128xf32>
    %21 = arith.addf %18, %20 : vector<64x128xf32>
    %22 = vector.extract_strided_slice %21 {offsets = [0, 64], sizes = [64, 64], strides = [1, 1]} : vector<64x128xf32> to vector<64x64xf32>
    %c0_12 = arith.constant 0 : index
    %c0_13 = arith.constant 0 : index
    %23 = vector.load %arg2[%c0_12, %c0_13] : memref<64x4xf32, #tpu.memory_space<vmem>>, vector<64x4xf32>
    %24 = vector.extract_strided_slice %23 {offsets = [0, 0], sizes = [64, 1], strides = [1, 1]} : vector<64x4xf32> to vector<64x1xf32>
    %25 = vector.extract_strided_slice %23 {offsets = [0, 1], sizes = [64, 1], strides = [1, 1]} : vector<64x4xf32> to vector<64x1xf32>
    %26 = vector.extract_strided_slice %23 {offsets = [0, 2], sizes = [64, 1], strides = [1, 1]} : vector<64x4xf32> to vector<64x1xf32>
    %27 = vector.extract_strided_slice %23 {offsets = [0, 3], sizes = [64, 1], strides = [1, 1]} : vector<64x4xf32> to vector<64x1xf32>
    %c0_14 = arith.constant 0 : index
    %c0_15 = arith.constant 0 : index
    %28 = vector.load %arg7[%c0_14, %c0_15] : memref<9x64xf32, #tpu.memory_space<vmem>>, vector<9x64xf32>
    %c1_i32 = arith.constant 1 : i32
    %29 = tpu.dynamic_rotate %22 by %c1_i32 dim 0 : vector<64x64xf32>, i32 -> vector<64x64xf32>
    %30 = vector.broadcast %26 : vector<64x1xf32> to vector<64x64xf32>
    %31 = arith.mulf %29, %30 : vector<64x64xf32>
    %c63_i32 = arith.constant 63 : i32
    %32 = tpu.dynamic_rotate %22 by %c63_i32 dim 0 : vector<64x64xf32>, i32 -> vector<64x64xf32>
    %33 = vector.broadcast %27 : vector<64x1xf32> to vector<64x64xf32>
    %34 = arith.mulf %32, %33 : vector<64x64xf32>
    %cst_16 = arith.constant 0.000000e+00 : f32
    %35 = vector.broadcast %cst_16 : f32 to vector<64x64xf32>
    %c8_i32 = arith.constant 8 : i32
    %36 = tpu.dynamic_rotate %31 by %c8_i32 dim 0 : vector<64x64xf32>, i32 -> vector<64x64xf32>
    %37 = vector.broadcast %24 : vector<64x1xf32> to vector<64x64xf32>
    %38 = arith.mulf %36, %37 : vector<64x64xf32>
    %39 = vector.extract_strided_slice %28 {offsets = [0, 0], sizes = [1, 64], strides = [1, 1]} : vector<9x64xf32> to vector<1x64xf32>
    %40 = vector.broadcast %39 : vector<1x64xf32> to vector<64x64xf32>
    %41 = arith.mulf %38, %40 : vector<64x64xf32>
    %42 = arith.addf %35, %41 : vector<64x64xf32>
    %c8_i32_17 = arith.constant 8 : i32
    %43 = tpu.dynamic_rotate %22 by %c8_i32_17 dim 0 : vector<64x64xf32>, i32 -> vector<64x64xf32>
    %44 = vector.broadcast %24 : vector<64x1xf32> to vector<64x64xf32>
    %45 = arith.mulf %43, %44 : vector<64x64xf32>
    %46 = vector.extract_strided_slice %28 {offsets = [1, 0], sizes = [1, 64], strides = [1, 1]} : vector<9x64xf32> to vector<1x64xf32>
    %47 = vector.broadcast %46 : vector<1x64xf32> to vector<64x64xf32>
    %48 = arith.mulf %45, %47 : vector<64x64xf32>
    %49 = arith.addf %42, %48 : vector<64x64xf32>
    %c8_i32_18 = arith.constant 8 : i32
    %50 = tpu.dynamic_rotate %34 by %c8_i32_18 dim 0 : vector<64x64xf32>, i32 -> vector<64x64xf32>
    %51 = vector.broadcast %24 : vector<64x1xf32> to vector<64x64xf32>
    %52 = arith.mulf %50, %51 : vector<64x64xf32>
    %53 = vector.extract_strided_slice %28 {offsets = [2, 0], sizes = [1, 64], strides = [1, 1]} : vector<9x64xf32> to vector<1x64xf32>
    %54 = vector.broadcast %53 : vector<1x64xf32> to vector<64x64xf32>
    %55 = arith.mulf %52, %54 : vector<64x64xf32>
    %56 = arith.addf %49, %55 : vector<64x64xf32>
    %57 = vector.extract_strided_slice %28 {offsets = [3, 0], sizes = [1, 64], strides = [1, 1]} : vector<9x64xf32> to vector<1x64xf32>
    %58 = vector.broadcast %57 : vector<1x64xf32> to vector<64x64xf32>
    %59 = arith.mulf %31, %58 : vector<64x64xf32>
    %60 = arith.addf %56, %59 : vector<64x64xf32>
    %61 = vector.extract_strided_slice %28 {offsets = [4, 0], sizes = [1, 64], strides = [1, 1]} : vector<9x64xf32> to vector<1x64xf32>
    %62 = vector.broadcast %61 : vector<1x64xf32> to vector<64x64xf32>
    %63 = arith.mulf %22, %62 : vector<64x64xf32>
    %64 = arith.addf %60, %63 : vector<64x64xf32>
    %65 = vector.extract_strided_slice %28 {offsets = [5, 0], sizes = [1, 64], strides = [1, 1]} : vector<9x64xf32> to vector<1x64xf32>
    %66 = vector.broadcast %65 : vector<1x64xf32> to vector<64x64xf32>
    %67 = arith.mulf %34, %66 : vector<64x64xf32>
    %68 = arith.addf %64, %67 : vector<64x64xf32>
    %c56_i32 = arith.constant 56 : i32
    %69 = tpu.dynamic_rotate %31 by %c56_i32 dim 0 : vector<64x64xf32>, i32 -> vector<64x64xf32>
    %70 = vector.broadcast %25 : vector<64x1xf32> to vector<64x64xf32>
    %71 = arith.mulf %69, %70 : vector<64x64xf32>
    %72 = vector.extract_strided_slice %28 {offsets = [6, 0], sizes = [1, 64], strides = [1, 1]} : vector<9x64xf32> to vector<1x64xf32>
    %73 = vector.broadcast %72 : vector<1x64xf32> to vector<64x64xf32>
    %74 = arith.mulf %71, %73 : vector<64x64xf32>
    %75 = arith.addf %68, %74 : vector<64x64xf32>
    %c56_i32_19 = arith.constant 56 : i32
    %76 = tpu.dynamic_rotate %22 by %c56_i32_19 dim 0 : vector<64x64xf32>, i32 -> vector<64x64xf32>
    %77 = vector.broadcast %25 : vector<64x1xf32> to vector<64x64xf32>
    %78 = arith.mulf %76, %77 : vector<64x64xf32>
    %79 = vector.extract_strided_slice %28 {offsets = [7, 0], sizes = [1, 64], strides = [1, 1]} : vector<9x64xf32> to vector<1x64xf32>
    %80 = vector.broadcast %79 : vector<1x64xf32> to vector<64x64xf32>
    %81 = arith.mulf %78, %80 : vector<64x64xf32>
    %82 = arith.addf %75, %81 : vector<64x64xf32>
    %c56_i32_20 = arith.constant 56 : i32
    %83 = tpu.dynamic_rotate %34 by %c56_i32_20 dim 0 : vector<64x64xf32>, i32 -> vector<64x64xf32>
    %84 = vector.broadcast %25 : vector<64x1xf32> to vector<64x64xf32>
    %85 = arith.mulf %83, %84 : vector<64x64xf32>
    %86 = vector.extract_strided_slice %28 {offsets = [8, 0], sizes = [1, 64], strides = [1, 1]} : vector<9x64xf32> to vector<1x64xf32>
    %87 = vector.broadcast %86 : vector<1x64xf32> to vector<64x64xf32>
    %88 = arith.mulf %85, %87 : vector<64x64xf32>
    %89 = arith.addf %82, %88 : vector<64x64xf32>
    %c0_21 = arith.constant 0 : index
    %c0_22 = arith.constant 0 : index
    %90 = vector.load %arg8[%c0_21, %c0_22] : memref<1x64xf32, #tpu.memory_space<vmem>>, vector<1x64xf32>
    %91 = vector.broadcast %90 : vector<1x64xf32> to vector<64x64xf32>
    %92 = arith.addf %89, %91 : vector<64x64xf32>
    %93 = vector.extract_strided_slice %21 {offsets = [0, 0], sizes = [64, 32], strides = [1, 1]} : vector<64x128xf32> to vector<64x32xf32>
    %94 = vector.extract_strided_slice %21 {offsets = [0, 32], sizes = [64, 32], strides = [1, 1]} : vector<64x128xf32> to vector<64x32xf32>
    %95 = arith.truncf %93 : vector<64x32xf32> to vector<64x32xbf16>
    %96 = arith.truncf %94 : vector<64x32xf32> to vector<64x32xbf16>
    %cst_23 = arith.constant dense<0.000000e+00> : vector<64x64xf32>
    %97 = tpu.matmul %95, %96, %cst_23 {dimension_numbers = #tpu.dot_dimension_numbers<[1], [1], [0], [0], [0, 0, 1, 0], [], []>} : vector<64x32xbf16>, vector<64x32xbf16>, vector<64x64xf32> -> vector<64x64xf32>
    %cst_24 = arith.constant 0.176776692 : f32
    %98 = vector.broadcast %cst_24 : f32 to vector<64x64xf32>
    %99 = arith.mulf %97, %98 : vector<64x64xf32>
    %cst_25 = arith.constant dense<0xFF800000> : vector<64xf32>
    %100 = vector.multi_reduction <maximumf>, %99, %cst_25 [1] : vector<64x64xf32> to vector<64xf32>
    %101 = vector.shape_cast %100 : vector<64xf32> to vector<64x1xf32>
    %102 = vector.broadcast %101 : vector<64x1xf32> to vector<64x64xf32>
    %103 = arith.subf %99, %102 : vector<64x64xf32>
    %104 = math.exp %103 : vector<64x64xf32>
    %cst_26 = arith.constant dense<0.000000e+00> : vector<64xf32>
    %105 = vector.multi_reduction <add>, %104, %cst_26 [1] : vector<64x64xf32> to vector<64xf32>
    %106 = vector.shape_cast %105 : vector<64xf32> to vector<64x1xf32>
    %107 = tpu.reciprocal %106 {approx = true} : vector<64x1xf32> -> vector<64x1xf32>
    %108 = vector.broadcast %107 : vector<64x1xf32> to vector<64x64xf32>
    %109 = arith.mulf %104, %108 : vector<64x64xf32>
    %110 = arith.truncf %109 : vector<64x64xf32> to vector<64x64xbf16>
    %111 = arith.truncf %22 : vector<64x64xf32> to vector<64x64xbf16>
    %cst_27 = arith.constant dense<0.000000e+00> : vector<64x64xf32>
    %112 = tpu.matmul %110, %111, %cst_27 {dimension_numbers = #tpu.dot_dimension_numbers<[1], [0], [0], [1], [0, 0, 1, 1], [], []>} : vector<64x64xbf16>, vector<64x64xbf16>, vector<64x64xf32> -> vector<64x64xf32>
    %113 = arith.addf %112, %92 : vector<64x64xf32>
    %c0_28 = arith.constant 0 : index
    %c0_29 = arith.constant 0 : index
    %114 = vector.load %arg9[%c0_28, %c0_29] : memref<64x64xbf16, #tpu.memory_space<vmem>>, vector<64x64xbf16>
    %115 = arith.truncf %113 : vector<64x64xf32> to vector<64x64xbf16>
    %cst_30 = arith.constant dense<0.000000e+00> : vector<64x64xf32>
    %116 = tpu.matmul %115, %114, %cst_30 {dimension_numbers = #tpu.dot_dimension_numbers<[1], [0], [0], [1], [0, 0, 1, 1], [], []>} : vector<64x64xbf16>, vector<64x64xbf16>, vector<64x64xf32> -> vector<64x64xf32>
    %117 = arith.addf %15, %116 : vector<64x64xf32>
    %c0_31 = arith.constant 0 : index
    %c0_32 = arith.constant 0 : index
    %118 = vector.load %arg10[%c0_31, %c0_32] : memref<1x64xf32, #tpu.memory_space<vmem>>, vector<1x64xf32>
    %119 = vector.broadcast %118 : vector<1x64xf32> to vector<64x64xf32>
    %120 = arith.addf %117, %119 : vector<64x64xf32>
    %121 = arith.truncf %120 : vector<64x64xf32> to vector<64x64xbf16>
    %c0_33 = arith.constant 0 : index
    %c0_34 = arith.constant 0 : index
    %122 = vector.load %arg11[%c0_33, %c0_34] : memref<64x128xbf16, #tpu.memory_space<vmem>>, vector<64x128xbf16>
    %cst_35 = arith.constant dense<0.000000e+00> : vector<64x128xf32>
    %123 = tpu.matmul %121, %122, %cst_35 {dimension_numbers = #tpu.dot_dimension_numbers<[1], [0], [0], [1], [0, 0, 1, 1], [], []>} : vector<64x64xbf16>, vector<64x128xbf16>, vector<64x128xf32> -> vector<64x128xf32>
    %c0_36 = arith.constant 0 : index
    %c0_37 = arith.constant 0 : index
    %124 = vector.load %arg12[%c0_36, %c0_37] : memref<1x128xf32, #tpu.memory_space<vmem>>, vector<1x128xf32>
    %125 = vector.broadcast %124 : vector<1x128xf32> to vector<64x128xf32>
    %126 = arith.addf %123, %125 : vector<64x128xf32>
    %127 = arith.negf %126 : vector<64x128xf32>
    %128 = math.exp %127 : vector<64x128xf32>
    %cst_38 = arith.constant 1.000000e+00 : f32
    %129 = vector.broadcast %cst_38 : f32 to vector<64x128xf32>
    %130 = arith.addf %129, %128 : vector<64x128xf32>
    %131 = arith.divf %129, %130 : vector<64x128xf32>
    %132 = arith.mulf %126, %131 : vector<64x128xf32>
    %133 = arith.truncf %132 : vector<64x128xf32> to vector<64x128xbf16>
    %c0_39 = arith.constant 0 : index
    %c0_40 = arith.constant 0 : index
    %134 = vector.load %arg13[%c0_39, %c0_40] : memref<128x64xbf16, #tpu.memory_space<vmem>>, vector<128x64xbf16>
    %cst_41 = arith.constant dense<0.000000e+00> : vector<64x64xf32>
    %135 = tpu.matmul %133, %134, %cst_41 {dimension_numbers = #tpu.dot_dimension_numbers<[1], [0], [0], [1], [0, 0, 1, 1], [], []>} : vector<64x128xbf16>, vector<128x64xbf16>, vector<64x64xf32> -> vector<64x64xf32>
    %c0_42 = arith.constant 0 : index
    %c0_43 = arith.constant 0 : index
    %136 = vector.load %arg14[%c0_42, %c0_43] : memref<1x64xf32, #tpu.memory_space<vmem>>, vector<1x64xf32>
    %137 = vector.broadcast %136 : vector<1x64xf32> to vector<64x64xf32>
    %138 = arith.addf %135, %137 : vector<64x64xf32>
    %139 = arith.addf %120, %138 : vector<64x64xf32>
    %140 = arith.truncf %14 : vector<64x64xf32> to vector<64x64xbf16>
    %c0_44 = arith.constant 0 : index
    %c0_45 = arith.constant 0 : index
    %141 = vector.load %arg15[%c0_44, %c0_45] : memref<128x128xbf16, #tpu.memory_space<vmem>>, vector<64x128xbf16>
    %cst_46 = arith.constant dense<0.000000e+00> : vector<64x128xf32>
    %142 = tpu.matmul %140, %141, %cst_46 {dimension_numbers = #tpu.dot_dimension_numbers<[1], [0], [0], [1], [0, 0, 1, 1], [], []>} : vector<64x64xbf16>, vector<64x128xbf16>, vector<64x128xf32> -> vector<64x128xf32>
    %143 = arith.truncf %139 : vector<64x64xf32> to vector<64x64xbf16>
    %c64 = arith.constant 64 : index
    %c0_47 = arith.constant 0 : index
    %144 = vector.load %arg15[%c64, %c0_47] : memref<128x128xbf16, #tpu.memory_space<vmem>>, vector<64x128xbf16>
    %cst_48 = arith.constant dense<0.000000e+00> : vector<64x128xf32>
    %145 = tpu.matmul %143, %144, %cst_48 {dimension_numbers = #tpu.dot_dimension_numbers<[1], [0], [0], [1], [0, 0, 1, 1], [], []>} : vector<64x64xbf16>, vector<64x128xbf16>, vector<64x128xf32> -> vector<64x128xf32>
    %146 = arith.addf %142, %145 : vector<64x128xf32>
    %c0_49 = arith.constant 0 : index
    %c0_50 = arith.constant 0 : index
    %147 = vector.load %arg16[%c0_49, %c0_50] : memref<1x128xf32, #tpu.memory_space<vmem>>, vector<1x128xf32>
    %148 = vector.broadcast %147 : vector<1x128xf32> to vector<64x128xf32>
    %149 = arith.addf %146, %148 : vector<64x128xf32>
    %150 = arith.negf %149 : vector<64x128xf32>
    %151 = math.exp %150 : vector<64x128xf32>
    %cst_51 = arith.constant 1.000000e+00 : f32
    %152 = vector.broadcast %cst_51 : f32 to vector<64x128xf32>
    %153 = arith.addf %152, %151 : vector<64x128xf32>
    %154 = arith.divf %152, %153 : vector<64x128xf32>
    %155 = arith.mulf %149, %154 : vector<64x128xf32>
    %c0_52 = arith.constant 0 : index
    %c0_53 = arith.constant 0 : index
    %c0_54 = arith.constant 0 : index
    %156 = vector.load %arg17[%c0_52, %c0_53, %c0_54] : memref<1x64x128xf32, #tpu.memory_space<vmem>>, vector<1x64x128xf32>
    %157 = vector.shape_cast %156 : vector<1x64x128xf32> to vector<64x128xf32>
    %158 = vector.shape_cast %155 : vector<64x128xf32> to vector<1x64x128xf32>
    tpu.vector_store %arg17[%c0_52, %c0_53, %c0_54], %158 {strides = array<i32>} : memref<1x64x128xf32, #tpu.memory_space<vmem>>, vector<1x64x128xf32>,
    return
  }
  func.func @transform_0(%arg0: i32) -> (i32, i32, i32) {
    %c0_i32 = arith.constant 0 : i32
    %c0_i32_0 = arith.constant 0 : i32
    %c0_i32_1 = arith.constant 0 : i32
    return %arg0, %c0_i32, %c0_i32_0 : i32, i32, i32
  }
  func.func @transform_1(%arg0: i32) -> (i32, i32) {
    %c0_i32 = arith.constant 0 : i32
    %c0_i32_0 = arith.constant 0 : i32
    %c0_i32_1 = arith.constant 0 : i32
    return %c0_i32, %c0_i32_0 : i32, i32
  }
  func.func @transform_2(%arg0: i32) -> (i32, i32) {
    %c0_i32 = arith.constant 0 : i32
    %c0_i32_0 = arith.constant 0 : i32
    %c0_i32_1 = arith.constant 0 : i32
    return %c0_i32, %c0_i32_0 : i32, i32
  }
  func.func @transform_3(%arg0: i32) -> (i32, i32) {
    %c0_i32 = arith.constant 0 : i32
    %c0_i32_0 = arith.constant 0 : i32
    %c0_i32_1 = arith.constant 0 : i32
    return %c0_i32, %c0_i32_0 : i32, i32
  }
  func.func @transform_4(%arg0: i32) -> (i32, i32) {
    %c0_i32 = arith.constant 0 : i32
    %c0_i32_0 = arith.constant 0 : i32
    %c0_i32_1 = arith.constant 0 : i32
    return %c0_i32, %c0_i32_0 : i32, i32
  }
  func.func @transform_5(%arg0: i32) -> (i32, i32) {
    %c0_i32 = arith.constant 0 : i32
    %c0_i32_0 = arith.constant 0 : i32
    %c0_i32_1 = arith.constant 0 : i32
    return %c0_i32, %c0_i32_0 : i32, i32
  }
  func.func @transform_6(%arg0: i32) -> (i32, i32) {
    %c0_i32 = arith.constant 0 : i32
    %c0_i32_0 = arith.constant 0 : i32
    %c0_i32_1 = arith.constant 0 : i32
    return %c0_i32, %c0_i32_0 : i32, i32
  }
  func.func @transform_7(%arg0: i32) -> (i32, i32) {
    %c0_i32 = arith.constant 0 : i32
    %c0_i32_0 = arith.constant 0 : i32
    %c0_i32_1 = arith.constant 0 : i32
    return %c0_i32, %c0_i32_0 : i32, i32
  }
  func.func @transform_8(%arg0: i32) -> (i32, i32) {
    %c0_i32 = arith.constant 0 : i32
    %c0_i32_0 = arith.constant 0 : i32
    %c0_i32_1 = arith.constant 0 : i32
    return %c0_i32, %c0_i32_0 : i32, i32
  }
  func.func @transform_9(%arg0: i32) -> (i32, i32) {
    %c0_i32 = arith.constant 0 : i32
    %c0_i32_0 = arith.constant 0 : i32
    %c0_i32_1 = arith.constant 0 : i32
    return %c0_i32, %c0_i32_0 : i32, i32
  }
  func.func @transform_10(%arg0: i32) -> (i32, i32) {
    %c0_i32 = arith.constant 0 : i32
    %c0_i32_0 = arith.constant 0 : i32
    %c0_i32_1 = arith.constant 0 : i32
    return %c0_i32, %c0_i32_0 : i32, i32
  }
  func.func @transform_11(%arg0: i32) -> (i32, i32) {
    %c0_i32 = arith.constant 0 : i32
    %c0_i32_0 = arith.constant 0 : i32
    %c0_i32_1 = arith.constant 0 : i32
    return %c0_i32, %c0_i32_0 : i32, i32
  }
  func.func @transform_12(%arg0: i32) -> (i32, i32) {
    %c0_i32 = arith.constant 0 : i32
    %c0_i32_0 = arith.constant 0 : i32
    %c0_i32_1 = arith.constant 0 : i32
    return %c0_i32, %c0_i32_0 : i32, i32
  }
  func.func @transform_13(%arg0: i32) -> (i32, i32) {
    %c0_i32 = arith.constant 0 : i32
    %c0_i32_0 = arith.constant 0 : i32
    %c0_i32_1 = arith.constant 0 : i32
    return %c0_i32, %c0_i32_0 : i32, i32
  }
  func.func @transform_14(%arg0: i32) -> (i32, i32) {
    %c0_i32 = arith.constant 0 : i32
    %c0_i32_0 = arith.constant 0 : i32
    %c0_i32_1 = arith.constant 0 : i32
    return %c0_i32, %c0_i32_0 : i32, i32
  }
  func.func @transform_15(%arg0: i32) -> (i32, i32) {
    %c0_i32 = arith.constant 0 : i32
    %c0_i32_0 = arith.constant 0 : i32
    %c0_i32_1 = arith.constant 0 : i32
    return %c0_i32, %c0_i32_0 : i32, i32
  }
  func.func @transform_16(%arg0: i32) -> (i32, i32, i32) {
    %c0_i32 = arith.constant 0 : i32
    %c0_i32_0 = arith.constant 0 : i32
    %c0_i32_1 = arith.constant 0 : i32
    return %arg0, %c0_i32, %c0_i32_0 : i32, i32, i32
  }
}

</mosaic_0001>

<llo_original>
// kernel: tpu_custom_call.1
$region0: #{tpu_custom_call.1}
  #allocation0 [shape = 'u32[]', space=smem, size = 0x4, offset = 0x4, fixed_abs, tag = 'smem constant byte address 0x4 - core index']
  #allocation1 [shape = 'u32[144,128]{1,0:T(1,128)}', space=vmem, size = 0x12000, scoped, tag = 'internal scratch']
  %s0 = inlined_call_operand.vmem [shape: f32[2,64,128], index: 0, kind: input, shape index: {}]
  %s1 = inlined_call_operand.vmem [shape: f32[64,4], index: 1, kind: input, shape index: {}]
  %s2 = inlined_call_operand.hbm [shape: bf16[128,128], index: 2, kind: input, shape index: {}]
  %s3 = inlined_call_operand.vmem [shape: f32[1,128], index: 3, kind: input, shape index: {}]
  %s4 = inlined_call_operand.hbm [shape: bf16[64,128], index: 4, kind: input, shape index: {}]
  %s5 = inlined_call_operand.vmem [shape: f32[1,128], index: 5, kind: input, shape index: {}]
  %s6 = inlined_call_operand.hbm [shape: f32[9,64], index: 6, kind: input, shape index: {}]
  %s7 = inlined_call_operand.vmem [shape: f32[1,64], index: 7, kind: input, shape index: {}]
  %s8 = inlined_call_operand.hbm [shape: bf16[64,64], index: 8, kind: input, shape index: {}]
  %s9 = inlined_call_operand.vmem [shape: f32[1,64], index: 9, kind: input, shape index: {}]
  %s10 = inlined_call_operand.hbm [shape: bf16[64,128], index: 10, kind: input, shape index: {}]
  %s11 = inlined_call_operand.vmem [shape: f32[1,128], index: 11, kind: input, shape index: {}]
  %s12 = inlined_call_operand.vmem [shape: bf16[128,64], index: 12, kind: input, shape index: {}]
  %s13 = inlined_call_operand.vmem [shape: f32[1,64], index: 13, kind: input, shape index: {}]
  %s14 = inlined_call_operand.hbm [shape: bf16[128,128], index: 14, kind: input, shape index: {}]
  %s15 = inlined_call_operand.vmem [shape: f32[1,128], index: 15, kind: input, shape index: {}]
  %s16 = inlined_call_operand.hbm [shape: f32[2,64,128], index: 16, kind: output, shape index: {}]
  %s17 = sld [smem:[#allocation0]]
  $region121: #{tpu_custom_call.1} parent=0
    _
  %s19 = ssub.s32 1, %s17
  %s20 = scalar_select 0, %s19, %s17
  $region1: #{tpu_custom_call.1} parent=0
    #allocation2 [shape = 'u8[32768]{0}', space=vmem, size = 0x8000, scoped, tag = 'input window, operand 2, single buffered']
    #allocation3 [shape = 's32[2]{0}', space=sflag, size = 0x8, scoped, tag = 'scoped memory for tpu_custom_call.1']
    #allocation4 [shape = 's32[2]{0}', space=sflag, size = 0x8, scoped, tag = 'scoped memory for tpu_custom_call.1']
    #allocation5 [shape = 'u8[16384]{0}', space=vmem, size = 0x4000, scoped, tag = 'input window, operand 4, single buffered']
    #allocation6 [shape = 's32[1]{0}', space=sflag, size = 0x4, scoped, tag = 'scoped memory for tpu_custom_call.1']
    #allocation7 [shape = 'u8[8192]{0}', space=vmem, size = 0x2000, scoped, tag = 'input window, operand 6, single buffered']
    #allocation8 [shape = 'u8[16384]{0}', space=vmem, size = 0x4000, scoped, tag = 'input window, operand 8, single buffered']
    #allocation9 [shape = 's32[1]{0}', space=sflag, size = 0x4, scoped, tag = 'scoped memory for tpu_custom_call.1']
    #allocation10 [shape = 'u8[16384]{0}', space=vmem, size = 0x4000, scoped, tag = 'input window, operand 10, single buffered']
    #allocation11 [shape = 'u8[32768]{0}', space=vmem, size = 0x8000, scoped, tag = 'input window, operand 14, single buffered']
    #allocation12 [shape = 's32[1]{0}', space=sflag, size = 0x4, scoped, tag = 'scoped memory for tpu_custom_call.1']
    #allocation13 [shape = 'u8[65536]{0}', space=vmem, size = 0x10000, scoped, tag = 'output window, operand 0']
    %21 = vsyncpa [#allocation3], 0
    %22 = vsyncpa [#allocation6], 0
    %23 = vsyncpa [#allocation9], 0
    %24 = vsyncpa [#allocation12], 0
    %25 = vsyncpa [#allocation4], 0
    %s26 = scalar_lea.sflag [#allocation4], 1
    %27 = vsyncpa %s26, 0
    loop: start=0, step=1, limit=4
    $region2: #{tpu_custom_call.1} parent=1 // loop_pre_header
      _
    $region3: #{tpu_custom_call.1} parent=1 // loop_header
      %s29 = sphi 0, %s33
      %p30 = scmp.ge.s32.totalorder %s29, 4
      %s39 = sphi 0, %s41
      %s42 = sphi 0, %s39
      %s43 = sphi 0, %s42
      %s59 = sphi 0, %s43
      %s63 = sphi 0, %s63
      %s65 = sphi 0, %s63
      %s66 = sphi 0, %s65
      %s80 = sphi 0, %s66
      %s84 = sphi 0, %s84
      %s86 = sphi 0, %s84
      %s87 = sphi 0, %s86
      %s101 = sphi 0, %s87
      %s105 = sphi 0, %s105
      %s107 = sphi 0, %s105
      %s108 = sphi 0, %s107
      %s122 = sphi 0, %s108
      %s126 = sphi 0, %s126
      %s128 = sphi 0, %s126
      %s129 = sphi 0, %s128
      %s143 = sphi 0, %s129
      %s147 = sphi 0, %s147
      %s149 = sphi 0, %s147
      %s150 = sphi 0, %s149
      %s164 = sphi 0, %s150
      %s168 = sphi 0, %s168
      %s170 = sphi 0, %s168
      %s171 = sphi 0, %s170
      %s185 = sphi 0, %s171
      %s189 = sphi 0, %s189
      %s191 = sphi 0, %s189
      %s192 = sphi 0, %s191
      %s206 = sphi 0, %s192
      %s210 = sphi 0, %s210
      %s212 = sphi 0, %s210
      %s213 = sphi 0, %s212
      %s227 = sphi 0, %s213
      %s231 = sphi 0, %s231
      %s233 = sphi 0, %s231
      %s234 = sphi 0, %s233
      %s248 = sphi 0, %s234
      %s252 = sphi 0, %s252
      %s254 = sphi 0, %s252
      %s255 = sphi 0, %s254
      %s269 = sphi 0, %s255
      %s273 = sphi 0, %s273
      %s275 = sphi 0, %s273
      %s276 = sphi 0, %s275
      %s290 = sphi 0, %s276
      %s294 = sphi 0, %s294
      %s296 = sphi 0, %s294
      %s297 = sphi 0, %s296
      %s311 = sphi 0, %s297
      %s315 = sphi 0, %s315
      %s317 = sphi 0, %s315
      %s318 = sphi 0, %s317
      %s332 = sphi 0, %s318
      %s336 = sphi 0, %s336
      %s338 = sphi 0, %s336
      %s339 = sphi 0, %s338
      %s353 = sphi 0, %s339
      %s357 = sphi 0, %s357
      %s359 = sphi 0, %s357
      %s360 = sphi 0, %s359
      %s374 = sphi 0, %s360
      %s380 = sphi 0, %s382
      %s383 = sphi 0, %s380
      %s384 = sphi 0, %s383
      %s400 = sphi 0, %s384
    $region4: #{tpu_custom_call.1} parent=1 // loop_header_branch
      %32 = sbr.rel (%p30) target = $region8
    $region5: #{tpu_custom_call.1} parent=1 // loop_body
      %s34 = ssub.s32 %s29, 1
      %s35 = ssub.s32 %s29, 2
      %s36 = sadd.s32 %s29, 1
      %s37 = ssub.s32 %s29, %s36
      %p38 = scmp.eq.s32.totalorder %s37, 0
      %s40 = sadd.s32 %s39, 1
      %s41 = scalar_select %p38, %s39, %s40
      %p44 = pneg %p38
      %p45 = scmp.eq.s32.totalorder %s29, 1
      %p46 = por %p44, %p45
      %p47 = scmp.ne.s32.totalorder %s39, %s42
      %p48 = scmp.eq.s32.totalorder %s29, 0
      %p49 = por %p47, %p48
      %p50 = scmp.ne.s32.totalorder %s39, %s42
      %p51 = scmp.eq.s32.totalorder %s34, 1
      %p52 = por %p50, %p51
      %p53 = scmp.ne.s32.totalorder %s42, %s43
      %p54 = scmp.eq.s32.totalorder %s34, 0
      %p55 = por %p53, %p54
      %p56 = scmp.ne.s32.totalorder %s42, %s43
      %p57 = scmp.eq.s32.totalorder %s35, 1
      %p58 = por %p56, %p57
      %p60 = scmp.ne.s32.totalorder %s43, %s59
      %p61 = scmp.eq.s32.totalorder %s35, 0
      %p62 = por %p60, %p61
      %s64 = sadd.s32 %s63, 1
      %p67 = scmp.eq.s32.totalorder %s29, 1
      %p68 = scmp.ne.s32.totalorder %s63, %s65
      %p69 = scmp.eq.s32.totalorder %s29, 0
      %p70 = por %p68, %p69
      %p71 = scmp.ne.s32.totalorder %s63, %s65
      %p72 = scmp.eq.s32.totalorder %s34, 1
      %p73 = por %p71, %p72
      %p74 = scmp.ne.s32.totalorder %s65, %s66
      %p75 = scmp.eq.s32.totalorder %s34, 0
      %p76 = por %p74, %p75
      %p77 = scmp.ne.s32.totalorder %s65, %s66
      %p78 = scmp.eq.s32.totalorder %s35, 1
      %p79 = por %p77, %p78
      %p81 = scmp.ne.s32.totalorder %s66, %s80
      %p82 = scmp.eq.s32.totalorder %s35, 0
      %p83 = por %p81, %p82
      %s85 = sadd.s32 %s84, 1
      %p88 = scmp.eq.s32.totalorder %s29, 1
      %p89 = scmp.ne.s32.totalorder %s84, %s86
      %p90 = scmp.eq.s32.totalorder %s29, 0
      %p91 = por %p89, %p90
      %p92 = scmp.ne.s32.totalorder %s84, %s86
      %p93 = scmp.eq.s32.totalorder %s34, 1
      %p94 = por %p92, %p93
      %p95 = scmp.ne.s32.totalorder %s86, %s87
      %p96 = scmp.eq.s32.totalorder %s34, 0
      %p97 = por %p95, %p96
      %p98 = scmp.ne.s32.totalorder %s86, %s87
      %p99 = scmp.eq.s32.totalorder %s35, 1
      %p100 = por %p98, %p99
      %p102 = scmp.ne.s32.totalorder %s87, %s101
      %p103 = scmp.eq.s32.totalorder %s35, 0
      %p104 = por %p102, %p103
      %s106 = sadd.s32 %s105, 1
      %p109 = scmp.eq.s32.totalorder %s29, 1
      %p110 = scmp.ne.s32.totalorder %s105, %s107
      %p111 = scmp.eq.s32.totalorder %s29, 0
      %p112 = por %p110, %p111
      %p113 = scmp.ne.s32.totalorder %s105, %s107
      %p114 = scmp.eq.s32.totalorder %s34, 1
      %p115 = por %p113, %p114
      %p116 = scmp.ne.s32.totalorder %s107, %s108
      %p117 = scmp.eq.s32.totalorder %s34, 0
      %p118 = por %p116, %p117
      %p119 = scmp.ne.s32.totalorder %s107, %s108
      %p120 = scmp.eq.s32.totalorder %s35, 1
      %p121 = por %p119, %p120
      %p123 = scmp.ne.s32.totalorder %s108, %s122
      %p124 = scmp.eq.s32.totalorder %s35, 0
      %p125 = por %p123, %p124
      %s127 = sadd.s32 %s126, 1
      %p130 = scmp.eq.s32.totalorder %s29, 1
      %p131 = scmp.ne.s32.totalorder %s126, %s128
      %p132 = scmp.eq.s32.totalorder %s29, 0
      %p133 = por %p131, %p132
      %p134 = scmp.ne.s32.totalorder %s126, %s128
      %p135 = scmp.eq.s32.totalorder %s34, 1
      %p136 = por %p134, %p135
      %p137 = scmp.ne.s32.totalorder %s128, %s129
      %p138 = scmp.eq.s32.totalorder %s34, 0
      %p139 = por %p137, %p138
      %p140 = scmp.ne.s32.totalorder %s128, %s129
      %p141 = scmp.eq.s32.totalorder %s35, 1
      %p142 = por %p140, %p141
      %p144 = scmp.ne.s32.totalorder %s129, %s143
      %p145 = scmp.eq.s32.totalorder %s35, 0
      %p146 = por %p144, %p145
      %s148 = sadd.s32 %s147, 1
      %p151 = scmp.eq.s32.totalorder %s29, 1
      %p152 = scmp.ne.s32.totalorder %s147, %s149
      %p153 = scmp.eq.s32.totalorder %s29, 0
      %p154 = por %p152, %p153
      %p155 = scmp.ne.s32.totalorder %s147, %s149
      %p156 = scmp.eq.s32.totalorder %s34, 1
      %p157 = por %p155, %p156
      %p158 = scmp.ne.s32.totalorder %s149, %s150
      %p159 = scmp.eq.s32.totalorder %s34, 0
      %p160 = por %p158, %p159
      %p161 = scmp.ne.s32.totalorder %s149, %s150
      %p162 = scmp.eq.s32.totalorder %s35, 1
      %p163 = por %p161, %p162
      %p165 = scmp.ne.s32.totalorder %s150, %s164
      %p166 = scmp.eq.s32.totalorder %s35, 0
      %p167 = por %p165, %p166
      %s169 = sadd.s32 %s168, 1
      %p172 = scmp.eq.s32.totalorder %s29, 1
      %p173 = scmp.ne.s32.totalorder %s168, %s170
      %p174 = scmp.eq.s32.totalorder %s29, 0
      %p175 = por %p173, %p174
      %p176 = scmp.ne.s32.totalorder %s168, %s170
      %p177 = scmp.eq.s32.totalorder %s34, 1
      %p178 = por %p176, %p177
      %p179 = scmp.ne.s32.totalorder %s170, %s171
      %p180 = scmp.eq.s32.totalorder %s34, 0
      %p181 = por %p179, %p180
      %p182 = scmp.ne.s32.totalorder %s170, %s171
      %p183 = scmp.eq.s32.totalorder %s35, 1
      %p184 = por %p182, %p183
      %p186 = scmp.ne.s32.totalorder %s171, %s185
      %p187 = scmp.eq.s32.totalorder %s35, 0
      %p188 = por %p186, %p187
      %s190 = sadd.s32 %s189, 1
      %p193 = scmp.eq.s32.totalorder %s29, 1
      %p194 = scmp.ne.s32.totalorder %s189, %s191
      %p195 = scmp.eq.s32.totalorder %s29, 0
      %p196 = por %p194, %p195
      %p197 = scmp.ne.s32.totalorder %s189, %s191
      %p198 = scmp.eq.s32.totalorder %s34, 1
      %p199 = por %p197, %p198
      %p200 = scmp.ne.s32.totalorder %s191, %s192
      %p201 = scmp.eq.s32.totalorder %s34, 0
      %p202 = por %p200, %p201
      %p203 = scmp.ne.s32.totalorder %s191, %s192
      %p204 = scmp.eq.s32.totalorder %s35, 1
      %p205 = por %p203, %p204
      %p207 = scmp.ne.s32.totalorder %s192, %s206
      %p208 = scmp.eq.s32.totalorder %s35, 0
      %p209 = por %p207, %p208
      %s211 = sadd.s32 %s210, 1
      %p214 = scmp.eq.s32.totalorder %s29, 1
      %p215 = scmp.ne.s32.totalorder %s210, %s212
      %p216 = scmp.eq.s32.totalorder %s29, 0
      %p217 = por %p215, %p216
      %p218 = scmp.ne.s32.totalorder %s210, %s212
      %p219 = scmp.eq.s32.totalorder %s34, 1
      %p220 = por %p218, %p219
      %p221 = scmp.ne.s32.totalorder %s212, %s213
      %p222 = scmp.eq.s32.totalorder %s34, 0
      %p223 = por %p221, %p222
      %p224 = scmp.ne.s32.totalorder %s212, %s213
      %p225 = scmp.eq.s32.totalorder %s35, 1
      %p226 = por %p224, %p225
      %p228 = scmp.ne.s32.totalorder %s213, %s227
      %p229 = scmp.eq.s32.totalorder %s35, 0
      %p230 = por %p228, %p229
      %s232 = sadd.s32 %s231, 1
      %p235 = scmp.eq.s32.totalorder %s29, 1
      %p236 = scmp.ne.s32.totalorder %s231, %s233
      %p237 = scmp.eq.s32.totalorder %s29, 0
      %p238 = por %p236, %p237
      %p239 = scmp.ne.s32.totalorder %s231, %s233
      %p240 = scmp.eq.s32.totalorder %s34, 1
      %p241 = por %p239, %p240
      %p242 = scmp.ne.s32.totalorder %s233, %s234
      %p243 = scmp.eq.s32.totalorder %s34, 0
      %p244 = por %p242, %p243
      %p245 = scmp.ne.s32.totalorder %s233, %s234
      %p246 = scmp.eq.s32.totalorder %s35, 1
      %p247 = por %p245, %p246
      %p249 = scmp.ne.s32.totalorder %s234, %s248
      %p250 = scmp.eq.s32.totalorder %s35, 0
      %p251 = por %p249, %p250
      %s253 = sadd.s32 %s252, 1
      %p256 = scmp.eq.s32.totalorder %s29, 1
      %p257 = scmp.ne.s32.totalorder %s252, %s254
      %p258 = scmp.eq.s32.totalorder %s29, 0
      %p259 = por %p257, %p258
      %p260 = scmp.ne.s32.totalorder %s252, %s254
      %p261 = scmp.eq.s32.totalorder %s34, 1
      %p262 = por %p260, %p261
      %p263 = scmp.ne.s32.totalorder %s254, %s255
      %p264 = scmp.eq.s32.totalorder %s34, 0
      %p265 = por %p263, %p264
      %p266 = scmp.ne.s32.totalorder %s254, %s255
      %p267 = scmp.eq.s32.totalorder %s35, 1
      %p268 = por %p266, %p267
      %p270 = scmp.ne.s32.totalorder %s255, %s269
      %p271 = scmp.eq.s32.totalorder %s35, 0
      %p272 = por %p270, %p271
      %s274 = sadd.s32 %s273, 1
      %p277 = scmp.eq.s32.totalorder %s29, 1
      %p278 = scmp.ne.s32.totalorder %s273, %s275
      %p279 = scmp.eq.s32.totalorder %s29, 0
      %p280 = por %p278, %p279
      %p281 = scmp.ne.s32.totalorder %s273, %s275
      %p282 = scmp.eq.s32.totalorder %s34, 1
      %p283 = por %p281, %p282
      %p284 = scmp.ne.s32.totalorder %s275, %s276
      %p285 = scmp.eq.s32.totalorder %s34, 0
      %p286 = por %p284, %p285
      %p287 = scmp.ne.s32.totalorder %s275, %s276
      %p288 = scmp.eq.s32.totalorder %s35, 1
      %p289 = por %p287, %p288
      %p291 = scmp.ne.s32.totalorder %s276, %s290
      %p292 = scmp.eq.s32.totalorder %s35, 0
      %p293 = por %p291, %p292
      %s295 = sadd.s32 %s294, 1
      %p298 = scmp.eq.s32.totalorder %s29, 1
      %p299 = scmp.ne.s32.totalorder %s294, %s296
      %p300 = scmp.eq.s32.totalorder %s29, 0
      %p301 = por %p299, %p300
      %p302 = scmp.ne.s32.totalorder %s294, %s296
      %p303 = scmp.eq.s32.totalorder %s34, 1
      %p304 = por %p302, %p303
      %p305 = scmp.ne.s32.totalorder %s296, %s297
      %p306 = scmp.eq.s32.totalorder %s34, 0
      %p307 = por %p305, %p306
      %p308 = scmp.ne.s32.totalorder %s296, %s297
      %p309 = scmp.eq.s32.totalorder %s35, 1
      %p310 = por %p308, %p309
      %p312 = scmp.ne.s32.totalorder %s297, %s311
      %p313 = scmp.eq.s32.totalorder %s35, 0
      %p314 = por %p312, %p313
      %s316 = sadd.s32 %s315, 1
      %p319 = scmp.eq.s32.totalorder %s29, 1
      %p320 = scmp.ne.s32.totalorder %s315, %s317
      %p321 = scmp.eq.s32.totalorder %s29, 0
      %p322 = por %p320, %p321
      %p323 = scmp.ne.s32.totalorder %s315, %s317
      %p324 = scmp.eq.s32.totalorder %s34, 1
      %p325 = por %p323, %p324
      %p326 = scmp.ne.s32.totalorder %s317, %s318
      %p327 = scmp.eq.s32.totalorder %s34, 0
      %p328 = por %p326, %p327
      %p329 = scmp.ne.s32.totalorder %s317, %s318
      %p330 = scmp.eq.s32.totalorder %s35, 1
      %p331 = por %p329, %p330
      %p333 = scmp.ne.s32.totalorder %s318, %s332
      %p334 = scmp.eq.s32.totalorder %s35, 0
      %p335 = por %p333, %p334
      %s337 = sadd.s32 %s336, 1
      %p340 = scmp.eq.s32.totalorder %s29, 1
      %p341 = scmp.ne.s32.totalorder %s336, %s338
      %p342 = scmp.eq.s32.totalorder %s29, 0
      %p343 = por %p341, %p342
      %p344 = scmp.ne.s32.totalorder %s336, %s338
      %p345 = scmp.eq.s32.totalorder %s34, 1
      %p346 = por %p344, %p345
      %p347 = scmp.ne.s32.totalorder %s338, %s339
      %p348 = scmp.eq.s32.totalorder %s34, 0
      %p349 = por %p347, %p348
      %p350 = scmp.ne.s32.totalorder %s338, %s339
      %p351 = scmp.eq.s32.totalorder %s35, 1
      %p352 = por %p350, %p351
      %p354 = scmp.ne.s32.totalorder %s339, %s353
      %p355 = scmp.eq.s32.totalorder %s35, 0
      %p356 = por %p354, %p355
      %s358 = sadd.s32 %s357, 1
      %p361 = scmp.eq.s32.totalorder %s29, 1
      %p362 = scmp.ne.s32.totalorder %s357, %s359
      %p363 = scmp.eq.s32.totalorder %s29, 0
      %p364 = por %p362, %p363
      %p365 = scmp.ne.s32.totalorder %s357, %s359
      %p366 = scmp.eq.s32.totalorder %s34, 1
      %p367 = por %p365, %p366
      %p368 = scmp.ne.s32.totalorder %s359, %s360
      %p369 = scmp.eq.s32.totalorder %s34, 0
      %p370 = por %p368, %p369
      %p371 = scmp.ne.s32.totalorder %s359, %s360
      %p372 = scmp.eq.s32.totalorder %s35, 1
      %p373 = por %p371, %p372
      %p375 = scmp.ne.s32.totalorder %s360, %s374
      %p376 = scmp.eq.s32.totalorder %s35, 0
      %p377 = por %p375, %p376
      %s378 = ssub.s32 %s29, %s36
      %p379 = scmp.eq.s32.totalorder %s378, 0
      %s381 = sadd.s32 %s380, 1
      %s382 = scalar_select %p379, %s380, %s381
      %p385 = pneg %p379
      %p386 = scmp.eq.s32.totalorder %s29, 1
      %p387 = por %p385, %p386
      %p388 = scmp.ne.s32.totalorder %s380, %s383
      %p389 = scmp.eq.s32.totalorder %s29, 0
      %p390 = por %p388, %p389
      %p391 = scmp.ne.s32.totalorder %s380, %s383
      %p392 = scmp.eq.s32.totalorder %s34, 1
      %p393 = por %p391, %p392
      %p394 = scmp.ne.s32.totalorder %s383, %s384
      %p395 = scmp.eq.s32.totalorder %s34, 0
      %p396 = por %p394, %p395
      %p397 = scmp.ne.s32.totalorder %s383, %s384
      %p398 = scmp.eq.s32.totalorder %s35, 1
      %p399 = por %p397, %p398
      %p401 = scmp.ne.s32.totalorder %s384, %s400
      %p402 = scmp.eq.s32.totalorder %s35, 0
      %p403 = por %p401, %p402
      %p404 = scmp.le.s32.totalorder 1, %s29
      %p405 = scmp.lt.s32.totalorder %s29, 3
      %p406 = pnand %p404, %p405
      %p407 = pneg %p406
      // Predicated region
      $region9: #{tpu_custom_call.1} parent=5 // pred_check
        _
      $region10: #{tpu_custom_call.1} parent=5 // pred_check_branch
        %409 = sbr.rel (%p406) target = $region12
      $region11: #{tpu_custom_call.1} parent=5 // pred_region
        %s410 = ssub.s32 %s29, 1
        // Predicated region
        $region13: #{tpu_custom_call.1} parent=11 // pred_check
          %p411 = pneg %p76
        $region14: #{tpu_custom_call.1} parent=11 // pred_check_branch
          %413 = sbr.rel (%p411) target = $region16
        $region15: #{tpu_custom_call.1} parent=11 // pred_region
          _
        $region16: #{tpu_custom_call.1} parent=11 // pred_fallthru
          _
        // Predicated region
        $region17: #{tpu_custom_call.1} parent=11 // pred_check
          %p414 = pneg %p97
        $region18: #{tpu_custom_call.1} parent=11 // pred_check_branch
          %416 = sbr.rel (%p414) target = $region20
        $region19: #{tpu_custom_call.1} parent=11 // pred_region
          %s418 = ssub.s32 1024, 1024
          %419 = vsyncadd [#allocation3], %s418
          %s420 = sshll.u32 [#allocation2], 4
          %s421 = int_to_ptr.vmem [resolvable:$true] %s420
          %426 = dma.hbm_to_vmem [thread:$0]  %s2, 1024, %s421, [#allocation3], 64, 64, 4
        $region20: #{tpu_custom_call.1} parent=11 // pred_fallthru
          _
        // Predicated region
        $region21: #{tpu_custom_call.1} parent=11 // pred_check
          %p427 = pneg %p118
        $region22: #{tpu_custom_call.1} parent=11 // pred_check_branch
          %429 = sbr.rel (%p427) target = $region24
        $region23: #{tpu_custom_call.1} parent=11 // pred_region
          _
        $region24: #{tpu_custom_call.1} parent=11 // pred_fallthru
          _
        // Predicated region
        $region25: #{tpu_custom_call.1} parent=11 // pred_check
          %p430 = pneg %p139
        $region26: #{tpu_custom_call.1} parent=11 // pred_check_branch
          %432 = sbr.rel (%p430) target = $region28
        $region27: #{tpu_custom_call.1} parent=11 // pred_region
          %s434 = ssub.s32 512, 512
          %435 = vsyncadd [#allocation6], %s434
          %s436 = sshll.u32 [#allocation5], 4
          %s437 = int_to_ptr.vmem [resolvable:$true] %s436
          %442 = dma.hbm_to_vmem [thread:$0]  %s4, 512, %s437, [#allocation6], 64, 64, 4
        $region28: #{tpu_custom_call.1} parent=11 // pred_fallthru
          _
        // Predicated region
        $region29: #{tpu_custom_call.1} parent=11 // pred_check
          %p443 = pneg %p160
        $region30: #{tpu_custom_call.1} parent=11 // pred_check_branch
          %445 = sbr.rel (%p443) target = $region32
        $region31: #{tpu_custom_call.1} parent=11 // pred_region
          _
        $region32: #{tpu_custom_call.1} parent=11 // pred_fallthru
          _
        // Predicated region
        $region33: #{tpu_custom_call.1} parent=11 // pred_check
          %p446 = pneg %p181
        $region34: #{tpu_custom_call.1} parent=11 // pred_check_branch
          %448 = sbr.rel (%p446) target = $region36
        $region35: #{tpu_custom_call.1} parent=11 // pred_region
          %s450 = ssub.s32 256, 256
          %451 = vsyncadd [#allocation6], %s450
          %s452 = sshll.u32 [#allocation7], 4
          %s453 = int_to_ptr.vmem [resolvable:$true] %s452
          %458 = dma.hbm_to_vmem [thread:$0]  %s6, 256, %s453, [#allocation6], 128, 128, 8
        $region36: #{tpu_custom_call.1} parent=11 // pred_fallthru
          _
        // Predicated region
        $region37: #{tpu_custom_call.1} parent=11 // pred_check
          %p459 = pneg %p202
        $region38: #{tpu_custom_call.1} parent=11 // pred_check_branch
          %461 = sbr.rel (%p459) target = $region40
        $region39: #{tpu_custom_call.1} parent=11 // pred_region
          _
        $region40: #{tpu_custom_call.1} parent=11 // pred_fallthru
          _
        // Predicated region
        $region41: #{tpu_custom_call.1} parent=11 // pred_check
          %p462 = pneg %p223
        $region42: #{tpu_custom_call.1} parent=11 // pred_check_branch
          %464 = sbr.rel (%p462) target = $region44
        $region43: #{tpu_custom_call.1} parent=11 // pred_region
          %s466 = ssub.s32 512, 512
          %467 = vsyncadd [#allocation9], %s466
          %s468 = sshll.u32 [#allocation8], 4
          %s469 = int_to_ptr.vmem [resolvable:$true] %s468
          %474 = dma.hbm_to_vmem [thread:$0]  %s8, 512, %s469, [#allocation9], 64, 64, 4
        $region44: #{tpu_custom_call.1} parent=11 // pred_fallthru
          _
        // Predicated region
        $region45: #{tpu_custom_call.1} parent=11 // pred_check
          %p475 = pneg %p244
        $region46: #{tpu_custom_call.1} parent=11 // pred_check_branch
          %477 = sbr.rel (%p475) target = $region48
        $region47: #{tpu_custom_call.1} parent=11 // pred_region
          _
        $region48: #{tpu_custom_call.1} parent=11 // pred_fallthru
          _
        // Predicated region
        $region49: #{tpu_custom_call.1} parent=11 // pred_check
          %p478 = pneg %p265
        $region50: #{tpu_custom_call.1} parent=11 // pred_check_branch
          %480 = sbr.rel (%p478) target = $region52
        $region51: #{tpu_custom_call.1} parent=11 // pred_region
          %s482 = ssub.s32 512, 512
          %483 = vsyncadd [#allocation9], %s482
          %s484 = sshll.u32 [#allocation10], 4
          %s485 = int_to_ptr.vmem [resolvable:$true] %s484
          %490 = dma.hbm_to_vmem [thread:$0]  %s10, 512, %s485, [#allocation9], 64, 64, 4
        $region52: #{tpu_custom_call.1} parent=11 // pred_fallthru
          _
        // Predicated region
        $region53: #{tpu_custom_call.1} parent=11 // pred_check
          %p491 = pneg %p286
        $region54: #{tpu_custom_call.1} parent=11 // pred_check_branch
          %493 = sbr.rel (%p491) target = $region56
        $region55: #{tpu_custom_call.1} parent=11 // pred_region
          _
        $region56: #{tpu_custom_call.1} parent=11 // pred_fallthru
          _
        // Predicated region
        $region57: #{tpu_custom_call.1} parent=11 // pred_check
          %p494 = pneg %p307
        $region58: #{tpu_custom_call.1} parent=11 // pred_check_branch
          %496 = sbr.rel (%p494) target = $region60
        $region59: #{tpu_custom_call.1} parent=11 // pred_region
          _
        $region60: #{tpu_custom_call.1} parent=11 // pred_fallthru
          _
        // Predicated region
        $region61: #{tpu_custom_call.1} parent=11 // pred_check
          %p497 = pneg %p328
        $region62: #{tpu_custom_call.1} parent=11 // pred_check_branch
          %499 = sbr.rel (%p497) target = $region64
        $region63: #{tpu_custom_call.1} parent=11 // pred_region
          _
        $region64: #{tpu_custom_call.1} parent=11 // pred_fallthru
          _
        // Predicated region
        $region65: #{tpu_custom_call.1} parent=11 // pred_check
          %p500 = pneg %p349
        $region66: #{tpu_custom_call.1} parent=11 // pred_check_branch
          %502 = sbr.rel (%p500) target = $region68
        $region67: #{tpu_custom_call.1} parent=11 // pred_region
          %s504 = ssub.s32 1024, 1024
          %505 = vsyncadd [#allocation12], %s504
          %s506 = sshll.u32 [#allocation11], 4
          %s507 = int_to_ptr.vmem [resolvable:$true] %s506
          %512 = dma.hbm_to_vmem [thread:$0]  %s14, 1024, %s507, [#allocation12], 64, 64, 4
        $region68: #{tpu_custom_call.1} parent=11 // pred_fallthru
          _
        // Predicated region
        $region69: #{tpu_custom_call.1} parent=11 // pred_check
          %p513 = pneg %p370
        $region70: #{tpu_custom_call.1} parent=11 // pred_check_branch
          %515 = sbr.rel (%p513) target = $region72
        $region71: #{tpu_custom_call.1} parent=11 // pred_region
          _
        $region72: #{tpu_custom_call.1} parent=11 // pred_fallthru
          _
      $region12: #{tpu_custom_call.1} parent=5 // pred_fallthru
        _
      %p516 = scmp.lt.s32.totalorder %s29, 2
      // Predicated region
      $region73: #{tpu_custom_call.1} parent=5 // pred_check
        %p517 = pneg %p516
      $region74: #{tpu_custom_call.1} parent=5 // pred_check_branch
        %519 = sbr.rel (%p517) target = $region76
      $region75: #{tpu_custom_call.1} parent=5 // pred_region
        // Predicated region
        $region77: #{tpu_custom_call.1} parent=75 // pred_check
          %p520 = pneg %p49
        $region78: #{tpu_custom_call.1} parent=75 // pred_check_branch
          %522 = sbr.rel (%p520) target = $region80
        $region79: #{tpu_custom_call.1} parent=75 // pred_region
          %p523 = scmp.lt.s32.totalorder %s29, 1
          %s524 = scalar_select %p523, %s29, 1
          %s525 = smul.addr %s524, 8
          %s526 = smul.addr %s525, 8
          %s527 = scalar_lea.vmem %s0, %s526
        $region80: #{tpu_custom_call.1} parent=75 // pred_fallthru
          _
      $region76: #{tpu_custom_call.1} parent=5 // pred_fallthru
        _
      %p528 = scmp.le.s32.totalorder 1, %s29
      %p529 = scmp.lt.s32.totalorder %s29, 3
      %p530 = pnand %p528, %p529
      %p531 = pneg %p530
      // Predicated region
      $region81: #{tpu_custom_call.1} parent=5 // pred_check
        _
      $region82: #{tpu_custom_call.1} parent=5 // pred_check_branch
        %533 = sbr.rel (%p530) target = $region84
      $region83: #{tpu_custom_call.1} parent=5 // pred_region
        %s534 = ssub.s32 %s29, 1
        // Predicated region
        $region85: #{tpu_custom_call.1} parent=83 // pred_check
          %p535 = pneg %p97
        $region86: #{tpu_custom_call.1} parent=83 // pred_check_branch
          %537 = sbr.rel (%p535) target = $region88
        $region87: #{tpu_custom_call.1} parent=83 // pred_region
          %538 = dma.done [#allocation3], 1024
        $region88: #{tpu_custom_call.1} parent=83 // pred_fallthru
          _
        // Predicated region
        $region89: #{tpu_custom_call.1} parent=83 // pred_check
          %p539 = pneg %p139
        $region90: #{tpu_custom_call.1} parent=83 // pred_check_branch
          %541 = sbr.rel (%p539) target = $region92
        $region91: #{tpu_custom_call.1} parent=83 // pred_region
          %542 = dma.done [#allocation6], 512
        $region92: #{tpu_custom_call.1} parent=83 // pred_fallthru
          _
        // Predicated region
        $region93: #{tpu_custom_call.1} parent=83 // pred_check
          %p543 = pneg %p181
        $region94: #{tpu_custom_call.1} parent=83 // pred_check_branch
          %545 = sbr.rel (%p543) target = $region96
        $region95: #{tpu_custom_call.1} parent=83 // pred_region
          %546 = dma.done [#allocation6], 256
        $region96: #{tpu_custom_call.1} parent=83 // pred_fallthru
          _
        // Predicated region
        $region97: #{tpu_custom_call.1} parent=83 // pred_check
          %p547 = pneg %p223
        $region98: #{tpu_custom_call.1} parent=83 // pred_check_branch
          %549 = sbr.rel (%p547) target = $region100
        $region99: #{tpu_custom_call.1} parent=83 // pred_region
          %550 = dma.done [#allocation9], 512
        $region100: #{tpu_custom_call.1} parent=83 // pred_fallthru
          _
        // Predicated region
        $region101: #{tpu_custom_call.1} parent=83 // pred_check
          %p551 = pneg %p265
        $region102: #{tpu_custom_call.1} parent=83 // pred_check_branch
          %553 = sbr.rel (%p551) target = $region104
        $region103: #{tpu_custom_call.1} parent=83 // pred_region
          %554 = dma.done [#allocation9], 512
        $region104: #{tpu_custom_call.1} parent=83 // pred_fallthru
          _
        // Predicated region
        $region105: #{tpu_custom_call.1} parent=83 // pred_check
          %p555 = pneg %p349
        $region106: #{tpu_custom_call.1} parent=83 // pred_check_branch
          %557 = sbr.rel (%p555) target = $region108
        $region107: #{tpu_custom_call.1} parent=83 // pred_region
          %558 = dma.done [#allocation12], 1024
        $region108: #{tpu_custom_call.1} parent=83 // pred_fallthru
          _
        %p559 = scmp.lt.s32.totalorder %s34, 1
        %s560 = scalar_select %p559, %s34, 1
        %s561 = smul.addr %s560, 8
        %s562 = smul.addr %s561, 8
        %s563 = scalar_lea.vmem %s0, %s562
        %p564 = pneg %p55
        %p565 = pneg %p52
        %p566 = pneg %p76
        %p567 = pneg %p73
        %p568 = pneg %p97
        %p569 = pneg %p94
        %p570 = pneg %p118
        %p571 = pneg %p115
        %p572 = pneg %p139
        %p573 = pneg %p136
        %p574 = pneg %p160
        %p575 = pneg %p157
        %p576 = pneg %p181
        %p577 = pneg %p178
        %p578 = pneg %p202
        %p579 = pneg %p199
        %p580 = pneg %p223
        %p581 = pneg %p220
        %p582 = pneg %p244
        %p583 = pneg %p241
        %p584 = pneg %p265
        %p585 = pneg %p262
        %p586 = pneg %p286
        %p587 = pneg %p283
        %p588 = pneg %p307
        %p589 = pneg %p304
        %p590 = pneg %p328
        %p591 = pneg %p325
        %p592 = pneg %p349
        %p593 = pneg %p346
        %p594 = pneg %p370
        %p595 = pneg %p367
        %p596 = pneg %p396
        %p597 = pneg %p393
        %s598 = sand.u32 %s383, 1
        %s599 = scalar_lea.sflag [#allocation4], %s598
        %s600 = sand.u32 %s383, 1
        %s601 = smul.addr %s600, 64
        %s602 = scalar_lea.vmem [#allocation13], %s601
        %p603 = scmp.lt.s32.totalorder %s34, 1
        %s604 = scalar_select %p603, %s34, 1
        %s605 = smul.addr %s604, 8
        %s606 = smul.addr %s605, 8
        %s607 = scalar_lea.vmem %s0, %s606
        %v609 = vld [vmem:[%s607] sm:$0xff]
        %v610 = vld [vmem:[%s607 + $0x8] sm:$0xff]
        %v611 = vld [vmem:[%s607 + $0x10] sm:$0xff]
        %v612 = vld [vmem:[%s607 + $0x18] sm:$0xff]
        %v613 = vld [vmem:[%s607 + $0x20] sm:$0xff]
        %v614 = vld [vmem:[%s607 + $0x28] sm:$0xff]
        %v615 = vld [vmem:[%s607 + $0x30] sm:$0xff]
        %v616 = vld [vmem:[%s607 + $0x38] sm:$0xff]
        %v617 = vpack.c.bf16 %v610, %v609
        %v618 = vpack.c.bf16 %v612, %v611
        %v619 = vpack.c.bf16 %v614, %v613
        %v620 = vpack.c.bf16 %v616, %v615
        %v621 = vld [vmem:[#allocation2] sm:$0xf]
        %v622 = vld [vmem:[#allocation2 + $0x4] sm:$0xf]
        %v623 = vld [vmem:[#allocation2 + $0x8] sm:$0xf]
        %v624 = vld [vmem:[#allocation2 + $0xc] sm:$0xf]
        %v625 = vld [vmem:[#allocation2 + $0x10] sm:$0xf]
        %v626 = vld [vmem:[#allocation2 + $0x14] sm:$0xf]
        %v627 = vld [vmem:[#allocation2 + $0x18] sm:$0xf]
        %v628 = vld [vmem:[#allocation2 + $0x1c] sm:$0xf]
        %v629 = vld [vmem:[#allocation2 + $0x20] sm:$0xf]
        %v630 = vld [vmem:[#allocation2 + $0x24] sm:$0xf]
        %v631 = vld [vmem:[#allocation2 + $0x28] sm:$0xf]
        %v632 = vld [vmem:[#allocation2 + $0x2c] sm:$0xf]
        %v633 = vld [vmem:[#allocation2 + $0x30] sm:$0xf]
        %v634 = vld [vmem:[#allocation2 + $0x34] sm:$0xf]
        %v635 = vld [vmem:[#allocation2 + $0x38] sm:$0xf]
        %v636 = vld [vmem:[#allocation2 + $0x3c] sm:$0xf]
        %v637 = vld [vmem:[%s3] sm:$0x1]
        %v639 = vlaneseq
        %v640 = vshrl.u32 %v639, 7
        %v641 = vsub.s32 0, %v640
        %v642 = vrot.slane %v637, %v641
        %v660 = vunpack.c.l.b16 %v621
        %v661 = vunpack.c.l.b16 %v622
        %v662 = vunpack.c.l.b16 %v623
        %v663 = vunpack.c.l.b16 %v624
        %v664 = vunpack.c.l.b16 %v625
        %v665 = vunpack.c.l.b16 %v626
        %v666 = vunpack.c.l.b16 %v627
        %v667 = vunpack.c.l.b16 %v628
        %v668 = vunpack.c.l.b16 %v629
        %v669 = vunpack.c.l.b16 %v630
        %v670 = vunpack.c.l.b16 %v631
        %v671 = vunpack.c.l.b16 %v632
        %v672 = vunpack.c.l.b16 %v633
        %v673 = vunpack.c.l.b16 %v634
        %v674 = vunpack.c.l.b16 %v635
        %v675 = vunpack.c.l.b16 %v636
        %v676 = vpack.c.b16 %v661, %v660
        %v677 = vpack.c.b16 %v663, %v662
        %v678 = vpack.c.b16 %v665, %v664
        %v679 = vpack.c.b16 %v667, %v666
        %v680 = vpack.c.b16 %v669, %v668
        %v681 = vpack.c.b16 %v671, %v670
        %v682 = vpack.c.b16 %v673, %v672
        %v683 = vpack.c.b16 %v675, %v674
        %692 = vmatprep.subr.bf16.mxu0 0
        %693 = vmatpush1.bf16.msra.mxu0 %v683
        %694 = vmatprep.subr.bf16.mxu0 0
        %695 = vmatpush1.bf16.msra.mxu0 %v682
        %696 = vmatprep.subr.bf16.mxu0 0
        %697 = vmatpush1.bf16.msra.mxu0 %v681
        %698 = vmatprep.subr.bf16.mxu0 0
        %699 = vmatpush1.bf16.msra.mxu0 %v680
        %700 = vmatprep.subr.bf16.mxu0 0
        %701 = vmatpush1.bf16.msra.mxu0 %v679
        %702 = vmatprep.subr.bf16.mxu0 0
        %703 = vmatpush1.bf16.msra.mxu0 %v678
        %704 = vmatprep.subr.bf16.mxu0 0
        %705 = vmatpush1.bf16.msra.mxu0 %v677
        %706 = vmatprep.subr.bf16.mxu0 0
        %707 = vmatpush1.bf16.msra.mxu0 %v676
        %708 = vmatprep.subr.bf16.mxu0 0
        %709 = vmatpush2.bf16.msra.mxu0 0
        %710 = vmatprep.subr.bf16.mxu0 0
        %711 = vmatpush2.bf16.msra.mxu0 0
        %712 = vmatprep.subr.bf16.mxu0 0
        %713 = vmatpush2.bf16.msra.mxu0 0
        %714 = vmatprep.subr.bf16.mxu0 0
        %715 = vmatpush2.bf16.msra.mxu0 0
        %716 = vmatprep.subr.bf16.mxu0 0
        %717 = vmatpush2.bf16.msra.mxu0 0
        %718 = vmatprep.subr.bf16.mxu0 0
        %719 = vmatpush2.bf16.msra.mxu0 0
        %720 = vmatprep.subr.bf16.mxu0 0
        %721 = vmatpush2.bf16.msra.mxu0 0
        %722 = vmatprep.subr.bf16.mxu0 0
        %723 = vmatpush2.bf16.msra.mxu0 0
        %724 = vmatprep.mubr.bf16.mxu0 0
        %725 = vmatmul.mubr.bf16.gmra.mxu0 %v617
        %v726 = vpop.f32.mrf.mxu0
        %v727 = vadd.f32 %v642, %v726
        %v728 = vpop.f32.mrf.mxu0
        %v729 = vpop.f32.mrf.mxu0
        %v730 = vadd.f32 %v642, %v729
        %v731 = vpop.f32.mrf.mxu0
        %732 = vmatprep.mubr.bf16.mxu0 0
        %733 = vmatmul.mubr.bf16.gmra.mxu0 %v618
        %v734 = vpop.f32.mrf.mxu0
        %v735 = vadd.f32 %v642, %v734
        %v736 = vpop.f32.mrf.mxu0
        %v737 = vpop.f32.mrf.mxu0
        %v738 = vadd.f32 %v642, %v737
        %v739 = vpop.f32.mrf.mxu0
        %740 = vmatprep.mubr.bf16.mxu0 0
        %741 = vmatmul.mubr.bf16.gmra.mxu0 %v619
        %v742 = vpop.f32.mrf.mxu0
        %v743 = vadd.f32 %v642, %v742
        %v744 = vpop.f32.mrf.mxu0
        %v745 = vpop.f32.mrf.mxu0
        %v746 = vadd.f32 %v642, %v745
        %v747 = vpop.f32.mrf.mxu0
        %748 = vmatprep.mubr.bf16.mxu0 0
        %749 = vmatmul.mubr.bf16.gmra.mxu0 %v620
        %v750 = vpop.f32.mrf.mxu0
        %v751 = vadd.f32 %v642, %v750
        %v752 = vpop.f32.mrf.mxu0
        %v753 = vpop.f32.mrf.mxu0
        %v754 = vadd.f32 %v642, %v753
        %v755 = vpop.f32.mrf.mxu0
        %756 = vdwg.mxu0
        %v757 = vxor.u32 %v727, 2147483648
        %v758 = vxor.u32 %v730, 2147483648
        %v759 = vxor.u32 %v735, 2147483648
        %v760 = vxor.u32 %v738, 2147483648
        %v761 = vxor.u32 %v743, 2147483648
        %v762 = vxor.u32 %v746, 2147483648
        %v763 = vxor.u32 %v751, 2147483648
        %v764 = vxor.u32 %v754, 2147483648
        %v765 = vmul.f32 %v757, 1.442695
        %v766 = vpow.pop %v765
        %v767 = vmul.f32 %v758, 1.442695
        %v768 = vpow.pop %v767
        %v769 = vmul.f32 %v759, 1.442695
        %v770 = vpow.pop %v769
        %v771 = vmul.f32 %v760, 1.442695
        %v772 = vpow.pop %v771
        %v773 = vmul.f32 %v761, 1.442695
        %v774 = vpow.pop %v773
        %v775 = vmul.f32 %v762, 1.442695
        %v776 = vpow.pop %v775
        %v777 = vmul.f32 %v763, 1.442695
        %v778 = vpow.pop %v777
        %v779 = vmul.f32 %v764, 1.442695
        %v780 = vpow.pop %v779
        %v781 = vadd.f32 %v766, 1.0
        %v782 = vadd.f32 %v768, 1.0
        %v783 = vadd.f32 %v770, 1.0
        %v784 = vadd.f32 %v772, 1.0
        %v785 = vadd.f32 %v774, 1.0
        %v786 = vadd.f32 %v776, 1.0
        %v787 = vadd.f32 %v778, 1.0
        %v788 = vadd.f32 %v780, 1.0
        %v789 = vrcp.pop %v781
        %v790 = vmul.f32 1.0, %v789
        %v791 = vrcp.pop %v782
        %v792 = vmul.f32 1.0, %v791
        %v793 = vrcp.pop %v783
        %v794 = vmul.f32 1.0, %v793
        %v795 = vrcp.pop %v784
        %v796 = vmul.f32 1.0, %v795
        %v797 = vrcp.pop %v785
        %v798 = vmul.f32 1.0, %v797
        %v799 = vrcp.pop %v786
        %v800 = vmul.f32 1.0, %v799
        %v801 = vrcp.pop %v787
        %v802 = vmul.f32 1.0, %v801
        %v803 = vrcp.pop %v788
        %v804 = vmul.f32 1.0, %v803
        %v805 = vmul.f32 %v727, %v790
        %v806 = vmul.f32 %v730, %v792
        %v807 = vmul.f32 %v735, %v794
        %v808 = vmul.f32 %v738, %v796
        %v809 = vmul.f32 %v743, %v798
        %v810 = vmul.f32 %v746, %v800
        %v811 = vmul.f32 %v751, %v802
        %v812 = vmul.f32 %v754, %v804
        %v813 = vpack.c.bf16 %v806, %v805
        %v814 = vpack.c.bf16 %v808, %v807
        %v815 = vpack.c.bf16 %v810, %v809
        %v816 = vpack.c.bf16 %v812, %v811
        %v817 = vld [vmem:[#allocation5] sm:$0xf]
        %v818 = vld [vmem:[#allocation5 + $0x4] sm:$0xf]
        %v819 = vld [vmem:[#allocation5 + $0x8] sm:$0xf]
        %v820 = vld [vmem:[#allocation5 + $0xc] sm:$0xf]
        %v821 = vld [vmem:[#allocation5 + $0x10] sm:$0xf]
        %v822 = vld [vmem:[#allocation5 + $0x14] sm:$0xf]
        %v823 = vld [vmem:[#allocation5 + $0x18] sm:$0xf]
        %v824 = vld [vmem:[#allocation5 + $0x1c] sm:$0xf]
        %v825 = vld [vmem:[%s5] sm:$0x1]
        %v827 = vlaneseq
        %v828 = vshrl.u32 %v827, 7
        %v829 = vsub.s32 0, %v828
        %v830 = vrot.slane %v825, %v829
        %836 = vrot.lane.b32.xlu0 %v813, 64
        %v837 = vpop.permute.xlu0 %836
        %838 = vrot.lane.b32.xlu0 %v814, 64
        %v839 = vpop.permute.xlu0 %838
        %840 = vrot.lane.b32.xlu0 %v815, 64
        %v841 = vpop.permute.xlu0 %840
        %842 = vrot.lane.b32.xlu0 %v816, 64
        %v843 = vpop.permute.xlu0 %842
        %v852 = vunpack.c.l.b16 %v817
        %v853 = vunpack.c.l.b16 %v818
        %v854 = vunpack.c.l.b16 %v819
        %v855 = vunpack.c.l.b16 %v820
        %v856 = vunpack.c.l.b16 %v821
        %v857 = vunpack.c.l.b16 %v822
        %v858 = vunpack.c.l.b16 %v823
        %v859 = vunpack.c.l.b16 %v824
        %v860 = vpack.c.b16 %v853, %v852
        %v861 = vpack.c.b16 %v855, %v854
        %v862 = vpack.c.b16 %v857, %v856
        %v863 = vpack.c.b16 %v859, %v858
        %vm868 = vcmask 523264
        %v870 = vsel %vm868, %v837, 0
        %v873 = vsel %vm868, %v839, 0
        %v876 = vsel %vm868, %v841, 0
        %v879 = vsel %vm868, %v843, 0
        %881 = vmatprep.subr.bf16.mxu0 0
        %882 = vmatpush1.bf16.msra.mxu0 0
        %883 = vmatprep.subr.bf16.mxu0 0
        %884 = vmatpush1.bf16.msra.mxu0 0
        %885 = vmatprep.subr.bf16.mxu0 0
        %886 = vmatpush1.bf16.msra.mxu0 0
        %887 = vmatprep.subr.bf16.mxu0 0
        %888 = vmatpush1.bf16.msra.mxu0 0
        %889 = vmatprep.subr.bf16.mxu0 0
        %890 = vmatpush1.bf16.msra.mxu0 %v863
        %891 = vmatprep.subr.bf16.mxu0 0
        %892 = vmatpush1.bf16.msra.mxu0 %v862
        %893 = vmatprep.subr.bf16.mxu0 0
        %894 = vmatpush1.bf16.msra.mxu0 %v861
        %895 = vmatprep.subr.bf16.mxu0 0
        %896 = vmatpush1.bf16.msra.mxu0 %v860
        %897 = vmatprep.subr.bf16.mxu0 0
        %898 = vmatpush2.bf16.msra.mxu0 0
        %899 = vmatprep.subr.bf16.mxu0 0
        %900 = vmatpush2.bf16.msra.mxu0 0
        %901 = vmatprep.subr.bf16.mxu0 0
        %902 = vmatpush2.bf16.msra.mxu0 0
        %903 = vmatprep.subr.bf16.mxu0 0
        %904 = vmatpush2.bf16.msra.mxu0 0
        %905 = vmatprep.subr.bf16.mxu0 0
        %906 = vmatpush2.bf16.msra.mxu0 0
        %907 = vmatprep.subr.bf16.mxu0 0
        %908 = vmatpush2.bf16.msra.mxu0 0
        %909 = vmatprep.subr.bf16.mxu0 0
        %910 = vmatpush2.bf16.msra.mxu0 0
        %911 = vmatprep.subr.bf16.mxu0 0
        %912 = vmatpush2.bf16.msra.mxu0 0
        %913 = vmatprep.mubr.bf16.mxu0 0
        %914 = vmatmul.mubr.bf16.gmra.mxu0 %v870
        %v915 = vpop.f32.mrf.mxu0
        %v916 = vadd.f32 %v830, %v915
        %v917 = vpop.f32.mrf.mxu0
        %v918 = vpop.f32.mrf.mxu0
        %v919 = vadd.f32 %v830, %v918
        %v920 = vpop.f32.mrf.mxu0
        %921 = vmatprep.mubr.bf16.mxu0 0
        %922 = vmatmul.mubr.bf16.gmra.mxu0 %v873
        %v923 = vpop.f32.mrf.mxu0
        %v924 = vadd.f32 %v830, %v923
        %v925 = vpop.f32.mrf.mxu0
        %v926 = vpop.f32.mrf.mxu0
        %v927 = vadd.f32 %v830, %v926
        %v928 = vpop.f32.mrf.mxu0
        %929 = vmatprep.mubr.bf16.mxu0 0
        %930 = vmatmul.mubr.bf16.gmra.mxu0 %v876
        %v931 = vpop.f32.mrf.mxu0
        %v932 = vadd.f32 %v830, %v931
        %v933 = vpop.f32.mrf.mxu0
        %v934 = vpop.f32.mrf.mxu0
        %v935 = vadd.f32 %v830, %v934
        %v936 = vpop.f32.mrf.mxu0
        %937 = vmatprep.mubr.bf16.mxu0 0
        %938 = vmatmul.mubr.bf16.gmra.mxu0 %v879
        %v939 = vpop.f32.mrf.mxu0
        %v940 = vadd.f32 %v830, %v939
        %v941 = vpop.f32.mrf.mxu0
        %v942 = vpop.f32.mrf.mxu0
        %v943 = vadd.f32 %v830, %v942
        %v944 = vpop.f32.mrf.mxu0
        %945 = vdwg.mxu0
        %v946 = vld [vmem:[%s1] sm:$0xff]
        %v947 = vld [vmem:[%s1 + $0x8] sm:$0xff]
        %v948 = vld [vmem:[%s1 + $0x10] sm:$0xff]
        %v949 = vld [vmem:[%s1 + $0x18] sm:$0xff]
        %v950 = vld [vmem:[%s1 + $0x20] sm:$0xff]
        %v951 = vld [vmem:[%s1 + $0x28] sm:$0xff]
        %v952 = vld [vmem:[%s1 + $0x30] sm:$0xff]
        %v953 = vld [vmem:[%s1 + $0x38] sm:$0xff]
        %v954 = vld [vmem:[#allocation7] sm:$0xff]
        %v955 = vld [vmem:[#allocation7 + $0x8] sm:$0x1]
        %964 = vrot.lane.b32.xlu0 %v916, 64
        %v965 = vpop.permute.xlu0 %964
        %966 = vrot.lane.b32.xlu0 %v919, 64
        %v967 = vpop.permute.xlu0 %966
        %968 = vrot.lane.b32.xlu0 %v924, 64
        %v969 = vpop.permute.xlu0 %968
        %970 = vrot.lane.b32.xlu0 %v927, 64
        %v971 = vpop.permute.xlu0 %970
        %972 = vrot.lane.b32.xlu0 %v932, 64
        %v973 = vpop.permute.xlu0 %972
        %974 = vrot.lane.b32.xlu0 %v935, 64
        %v975 = vpop.permute.xlu0 %974
        %976 = vrot.lane.b32.xlu0 %v940, 64
        %v977 = vpop.permute.xlu0 %976
        %978 = vrot.lane.b32.xlu0 %v943, 64
        %v979 = vpop.permute.xlu0 %978
        %v988 = vrot.slane %v965, 7
        %v989 = vrot.slane %v967, 7
        %v990 = vrot.slane %v969, 7
        %v991 = vrot.slane %v971, 7
        %v992 = vrot.slane %v973, 7
        %v993 = vrot.slane %v975, 7
        %v994 = vrot.slane %v977, 7
        %v995 = vrot.slane %v979, 7
        %v996 = vlaneseq
        %v997 = vshrl.u32 %v996, 7
        %vm998 = vcmp.lt.s32.totalorder %v997, 1
        %v999 = vsel %vm998, %v994, %v995
        %v1000 = vsel %vm998, %v993, %v994
        %v1001 = vsel %vm998, %v992, %v993
        %v1002 = vsel %vm998, %v991, %v992
        %v1003 = vsel %vm998, %v990, %v991
        %v1004 = vsel %vm998, %v989, %v990
        %v1005 = vsel %vm998, %v988, %v989
        %v1006 = vsel %vm998, %v995, %v988
        %1008 = vset.pattern.permute.xlu0 2
        %1009 = vperm.xlu0 %1008, %v946
        %v1010 = vpop.permute.xlu0 %1009
        %1013 = vset.pattern.permute.xlu0 2
        %1014 = vperm.xlu0 %1013, %v947
        %v1015 = vpop.permute.xlu0 %1014
        %1018 = vset.pattern.permute.xlu0 2
        %1019 = vperm.xlu0 %1018, %v948
        %v1020 = vpop.permute.xlu0 %1019
        %1023 = vset.pattern.permute.xlu0 2
        %1024 = vperm.xlu0 %1023, %v949
        %v1025 = vpop.permute.xlu0 %1024
        %1028 = vset.pattern.permute.xlu0 2
        %1029 = vperm.xlu0 %1028, %v950
        %v1030 = vpop.permute.xlu0 %1029
        %1033 = vset.pattern.permute.xlu0 2
        %1034 = vperm.xlu0 %1033, %v951
        %v1035 = vpop.permute.xlu0 %1034
        %1038 = vset.pattern.permute.xlu0 2
        %1039 = vperm.xlu0 %1038, %v952
        %v1040 = vpop.permute.xlu0 %1039
        %1043 = vset.pattern.permute.xlu0 2
        %1044 = vperm.xlu0 %1043, %v953
        %v1045 = vpop.permute.xlu0 %1044
        %v1047 = vmul.f32 %v1006, %v1010
        %v1048 = vmul.f32 %v1005, %v1015
        %v1049 = vmul.f32 %v1004, %v1020
        %v1050 = vmul.f32 %v1003, %v1025
        %v1051 = vmul.f32 %v1002, %v1030
        %v1052 = vmul.f32 %v1001, %v1035
        %v1053 = vmul.f32 %v1000, %v1040
        %v1054 = vmul.f32 %v999, %v1045
        %v1055 = vrot.slane %v965, 1
        %v1056 = vrot.slane %v967, 1
        %v1057 = vrot.slane %v969, 1
        %v1058 = vrot.slane %v971, 1
        %v1059 = vrot.slane %v973, 1
        %v1060 = vrot.slane %v975, 1
        %v1061 = vrot.slane %v977, 1
        %v1062 = vrot.slane %v979, 1
        %vm1063 = vcmp.lt.s32.totalorder %v997, 7
        %v1064 = vsel %vm1063, %v1061, %v1062
        %v1065 = vsel %vm1063, %v1060, %v1061
        %v1066 = vsel %vm1063, %v1059, %v1060
        %v1067 = vsel %vm1063, %v1058, %v1059
        %v1068 = vsel %vm1063, %v1057, %v1058
        %v1069 = vsel %vm1063, %v1056, %v1057
        %v1070 = vsel %vm1063, %v1055, %v1056
        %v1071 = vsel %vm1063, %v1062, %v1055
        %1072 = vset.pattern.permute.xlu0 3
        %1073 = vperm.xlu0 %1072, %v946
        %v1074 = vpop.permute.xlu0 %1073
        %1076 = vset.pattern.permute.xlu0 3
        %1077 = vperm.xlu0 %1076, %v947
        %v1078 = vpop.permute.xlu0 %1077
        %1080 = vset.pattern.permute.xlu0 3
        %1081 = vperm.xlu0 %1080, %v948
        %v1082 = vpop.permute.xlu0 %1081
        %1084 = vset.pattern.permute.xlu0 3
        %1085 = vperm.xlu0 %1084, %v949
        %v1086 = vpop.permute.xlu0 %1085
        %1088 = vset.pattern.permute.xlu0 3
        %1089 = vperm.xlu0 %1088, %v950
        %v1090 = vpop.permute.xlu0 %1089
        %1092 = vset.pattern.permute.xlu0 3
        %1093 = vperm.xlu0 %1092, %v951
        %v1094 = vpop.permute.xlu0 %1093
        %1096 = vset.pattern.permute.xlu0 3
        %1097 = vperm.xlu0 %1096, %v952
        %v1098 = vpop.permute.xlu0 %1097
        %1100 = vset.pattern.permute.xlu0 3
        %1101 = vperm.xlu0 %1100, %v953
        %v1102 = vpop.permute.xlu0 %1101
        %v1104 = vmul.f32 %v1070, %v1074
        %v1105 = vmul.f32 %v1069, %v1078
        %v1106 = vmul.f32 %v1068, %v1082
        %v1107 = vmul.f32 %v1067, %v1086
        %v1108 = vmul.f32 %v1066, %v1090
        %v1109 = vmul.f32 %v1065, %v1094
        %v1110 = vmul.f32 %v1064, %v1098
        %v1111 = vmul.f32 %v1071, %v1102
        %1112 = vset.pattern.permute.xlu0 0
        %1113 = vperm.xlu0 %1112, %v946
        %v1114 = vpop.permute.xlu0 %1113
        %1116 = vset.pattern.permute.xlu0 0
        %1117 = vperm.xlu0 %1116, %v947
        %v1118 = vpop.permute.xlu0 %1117
        %1120 = vset.pattern.permute.xlu0 0
        %1121 = vperm.xlu0 %1120, %v948
        %v1122 = vpop.permute.xlu0 %1121
        %1124 = vset.pattern.permute.xlu0 0
        %1125 = vperm.xlu0 %1124, %v949
        %v1126 = vpop.permute.xlu0 %1125
        %1128 = vset.pattern.permute.xlu0 0
        %1129 = vperm.xlu0 %1128, %v950
        %v1130 = vpop.permute.xlu0 %1129
        %1132 = vset.pattern.permute.xlu0 0
        %1133 = vperm.xlu0 %1132, %v951
        %v1134 = vpop.permute.xlu0 %1133
        %1136 = vset.pattern.permute.xlu0 0
        %1137 = vperm.xlu0 %1136, %v952
        %v1138 = vpop.permute.xlu0 %1137
        %1140 = vset.pattern.permute.xlu0 0
        %1141 = vperm.xlu0 %1140, %v953
        %v1142 = vpop.permute.xlu0 %1141
        %v1144 = vmul.f32 %v1054, %v1114
        %v1145 = vmul.f32 %v1047, %v1118
        %v1146 = vmul.f32 %v1048, %v1122
        %v1147 = vmul.f32 %v1049, %v1126
        %v1148 = vmul.f32 %v1050, %v1130
        %v1149 = vmul.f32 %v1051, %v1134
        %v1150 = vmul.f32 %v1052, %v1138
        %v1151 = vmul.f32 %v1053, %v1142
        %v1152 = vlaneseq
        %v1153 = vshrl.u32 %v1152, 7
        %v1154 = vsub.s32 0, %v1153
        %v1155 = vrot.slane %v954, %v1154
        %v1156 = vmul.f32 %v1144, %v1155
        %v1157 = vmul.f32 %v1145, %v1155
        %v1158 = vmul.f32 %v1146, %v1155
        %v1159 = vmul.f32 %v1147, %v1155
        %v1160 = vmul.f32 %v1148, %v1155
        %v1161 = vmul.f32 %v1149, %v1155
        %v1162 = vmul.f32 %v1150, %v1155
        %v1163 = vmul.f32 %v1151, %v1155
        %v1164 = vadd.f32 %v1156, 0.0
        %v1165 = vadd.f32 %v1157, 0.0
        %v1166 = vadd.f32 %v1158, 0.0
        %v1167 = vadd.f32 %v1159, 0.0
        %v1168 = vadd.f32 %v1160, 0.0
        %v1169 = vadd.f32 %v1161, 0.0
        %v1170 = vadd.f32 %v1162, 0.0
        %v1171 = vadd.f32 %v1163, 0.0
        %v1172 = vmul.f32 %v979, %v1114
        %v1173 = vmul.f32 %v965, %v1118
        %v1174 = vmul.f32 %v967, %v1122
        %v1175 = vmul.f32 %v969, %v1126
        %v1176 = vmul.f32 %v971, %v1130
        %v1177 = vmul.f32 %v973, %v1134
        %v1178 = vmul.f32 %v975, %v1138
        %v1179 = vmul.f32 %v977, %v1142
        %v1180 = vlaneseq
        %v1181 = vshrl.u32 %v1180, 7
        %v1182 = vsub.s32 1, %v1181
        %v1183 = vrot.slane %v954, %v1182
        %v1184 = vmul.f32 %v1172, %v1183
        %v1185 = vmul.f32 %v1173, %v1183
        %v1186 = vmul.f32 %v1174, %v1183
        %v1187 = vmul.f32 %v1175, %v1183
        %v1188 = vmul.f32 %v1176, %v1183
        %v1189 = vmul.f32 %v1177, %v1183
        %v1190 = vmul.f32 %v1178, %v1183
        %v1191 = vmul.f32 %v1179, %v1183
        %v1192 = vadd.f32 %v1164, %v1184
        %v1193 = vadd.f32 %v1165, %v1185
        %v1194 = vadd.f32 %v1166, %v1186
        %v1195 = vadd.f32 %v1167, %v1187
        %v1196 = vadd.f32 %v1168, %v1188
        %v1197 = vadd.f32 %v1169, %v1189
        %v1198 = vadd.f32 %v1170, %v1190
        %v1199 = vadd.f32 %v1171, %v1191
        %v1200 = vmul.f32 %v1111, %v1114
        %v1201 = vmul.f32 %v1104, %v1118
        %v1202 = vmul.f32 %v1105, %v1122
        %v1203 = vmul.f32 %v1106, %v1126
        %v1204 = vmul.f32 %v1107, %v1130
        %v1205 = vmul.f32 %v1108, %v1134
        %v1206 = vmul.f32 %v1109, %v1138
        %v1207 = vmul.f32 %v1110, %v1142
        %v1208 = vlaneseq
        %v1209 = vshrl.u32 %v1208, 7
        %v1210 = vsub.s32 2, %v1209
        %v1211 = vrot.slane %v954, %v1210
        %v1212 = vmul.f32 %v1200, %v1211
        %v1213 = vmul.f32 %v1201, %v1211
        %v1214 = vmul.f32 %v1202, %v1211
        %v1215 = vmul.f32 %v1203, %v1211
        %v1216 = vmul.f32 %v1204, %v1211
        %v1217 = vmul.f32 %v1205, %v1211
        %v1218 = vmul.f32 %v1206, %v1211
        %v1219 = vmul.f32 %v1207, %v1211
        %v1220 = vadd.f32 %v1192, %v1212
        %v1221 = vadd.f32 %v1193, %v1213
        %v1222 = vadd.f32 %v1194, %v1214
        %v1223 = vadd.f32 %v1195, %v1215
        %v1224 = vadd.f32 %v1196, %v1216
        %v1225 = vadd.f32 %v1197, %v1217
        %v1226 = vadd.f32 %v1198, %v1218
        %v1227 = vadd.f32 %v1199, %v1219
        %v1228 = vlaneseq
        %v1229 = vshrl.u32 %v1228, 7
        %v1230 = vsub.s32 3, %v1229
        %v1231 = vrot.slane %v954, %v1230
        %v1232 = vmul.f32 %v1047, %v1231
        %v1233 = vmul.f32 %v1048, %v1231
        %v1234 = vmul.f32 %v1049, %v1231
        %v1235 = vmul.f32 %v1050, %v1231
        %v1236 = vmul.f32 %v1051, %v1231
        %v1237 = vmul.f32 %v1052, %v1231
        %v1238 = vmul.f32 %v1053, %v1231
        %v1239 = vmul.f32 %v1054, %v1231
        %v1240 = vadd.f32 %v1220, %v1232
        %v1241 = vadd.f32 %v1221, %v1233
        %v1242 = vadd.f32 %v1222, %v1234
        %v1243 = vadd.f32 %v1223, %v1235
        %v1244 = vadd.f32 %v1224, %v1236
        %v1245 = vadd.f32 %v1225, %v1237
        %v1246 = vadd.f32 %v1226, %v1238
        %v1247 = vadd.f32 %v1227, %v1239
        %v1248 = vlaneseq
        %v1249 = vshrl.u32 %v1248, 7
        %v1250 = vsub.s32 4, %v1249
        %v1251 = vrot.slane %v954, %v1250
        %1253 = vrot.lane.b32.xlu0 %v1251, 64
        %v1254 = vpop.permute.xlu0 %1253
        %v1256 = vmul.f32 %v916, %v1254
        %v1257 = vmul.f32 %v919, %v1254
        %v1258 = vmul.f32 %v924, %v1254
        %v1259 = vmul.f32 %v927, %v1254
        %v1260 = vmul.f32 %v932, %v1254
        %v1261 = vmul.f32 %v935, %v1254
        %v1262 = vmul.f32 %v940, %v1254
        %v1263 = vmul.f32 %v943, %v1254
        %1272 = vrot.lane.b32.xlu0 %v1256, 64
        %v1273 = vpop.permute.xlu0 %1272
        %1274 = vrot.lane.b32.xlu0 %v1257, 64
        %v1275 = vpop.permute.xlu0 %1274
        %1276 = vrot.lane.b32.xlu0 %v1258, 64
        %v1277 = vpop.permute.xlu0 %1276
        %1278 = vrot.lane.b32.xlu0 %v1259, 64
        %v1279 = vpop.permute.xlu0 %1278
        %1280 = vrot.lane.b32.xlu0 %v1260, 64
        %v1281 = vpop.permute.xlu0 %1280
        %1282 = vrot.lane.b32.xlu0 %v1261, 64
        %v1283 = vpop.permute.xlu0 %1282
        %1284 = vrot.lane.b32.xlu0 %v1262, 64
        %v1285 = vpop.permute.xlu0 %1284
        %1286 = vrot.lane.b32.xlu0 %v1263, 64
        %v1287 = vpop.permute.xlu0 %1286
        %v1296 = vadd.f32 %v1240, %v1273
        %v1297 = vadd.f32 %v1241, %v1275
        %v1298 = vadd.f32 %v1242, %v1277
        %v1299 = vadd.f32 %v1243, %v1279
        %v1300 = vadd.f32 %v1244, %v1281
        %v1301 = vadd.f32 %v1245, %v1283
        %v1302 = vadd.f32 %v1246, %v1285
        %v1303 = vadd.f32 %v1247, %v1287
        %v1304 = vlaneseq
        %v1305 = vshrl.u32 %v1304, 7
        %v1306 = vsub.s32 5, %v1305
        %v1307 = vrot.slane %v954, %v1306
        %v1308 = vmul.f32 %v1104, %v1307
        %v1309 = vmul.f32 %v1105, %v1307
        %v1310 = vmul.f32 %v1106, %v1307
        %v1311 = vmul.f32 %v1107, %v1307
        %v1312 = vmul.f32 %v1108, %v1307
        %v1313 = vmul.f32 %v1109, %v1307
        %v1314 = vmul.f32 %v1110, %v1307
        %v1315 = vmul.f32 %v1111, %v1307
        %v1316 = vadd.f32 %v1296, %v1308
        %v1317 = vadd.f32 %v1297, %v1309
        %v1318 = vadd.f32 %v1298, %v1310
        %v1319 = vadd.f32 %v1299, %v1311
        %v1320 = vadd.f32 %v1300, %v1312
        %v1321 = vadd.f32 %v1301, %v1313
        %v1322 = vadd.f32 %v1302, %v1314
        %v1323 = vadd.f32 %v1303, %v1315
        %1324 = vset.pattern.permute.xlu0 1
        %1325 = vperm.xlu0 %1324, %v946
        %v1326 = vpop.permute.xlu0 %1325
        %1328 = vset.pattern.permute.xlu0 1
        %1329 = vperm.xlu0 %1328, %v947
        %v1330 = vpop.permute.xlu0 %1329
        %1332 = vset.pattern.permute.xlu0 1
        %1333 = vperm.xlu0 %1332, %v948
        %v1334 = vpop.permute.xlu0 %1333
        %1336 = vset.pattern.permute.xlu0 1
        %1337 = vperm.xlu0 %1336, %v949
        %v1338 = vpop.permute.xlu0 %1337
        %1340 = vset.pattern.permute.xlu0 1
        %1341 = vperm.xlu0 %1340, %v950
        %v1342 = vpop.permute.xlu0 %1341
        %1344 = vset.pattern.permute.xlu0 1
        %1345 = vperm.xlu0 %1344, %v951
        %v1346 = vpop.permute.xlu0 %1345
        %1348 = vset.pattern.permute.xlu0 1
        %1349 = vperm.xlu0 %1348, %v952
        %v1350 = vpop.permute.xlu0 %1349
        %1352 = vset.pattern.permute.xlu0 1
        %1353 = vperm.xlu0 %1352, %v953
        %v1354 = vpop.permute.xlu0 %1353
        %v1356 = vmul.f32 %v1048, %v1326
        %v1357 = vmul.f32 %v1049, %v1330
        %v1358 = vmul.f32 %v1050, %v1334
        %v1359 = vmul.f32 %v1051, %v1338
        %v1360 = vmul.f32 %v1052, %v1342
        %v1361 = vmul.f32 %v1053, %v1346
        %v1362 = vmul.f32 %v1054, %v1350
        %v1363 = vmul.f32 %v1047, %v1354
        %v1364 = vlaneseq
        %v1365 = vshrl.u32 %v1364, 7
        %v1366 = vsub.s32 6, %v1365
        %v1367 = vrot.slane %v954, %v1366
        %v1368 = vmul.f32 %v1356, %v1367
        %v1369 = vmul.f32 %v1357, %v1367
        %v1370 = vmul.f32 %v1358, %v1367
        %v1371 = vmul.f32 %v1359, %v1367
        %v1372 = vmul.f32 %v1360, %v1367
        %v1373 = vmul.f32 %v1361, %v1367
        %v1374 = vmul.f32 %v1362, %v1367
        %v1375 = vmul.f32 %v1363, %v1367
        %v1376 = vadd.f32 %v1316, %v1368
        %v1377 = vadd.f32 %v1317, %v1369
        %v1378 = vadd.f32 %v1318, %v1370
        %v1379 = vadd.f32 %v1319, %v1371
        %v1380 = vadd.f32 %v1320, %v1372
        %v1381 = vadd.f32 %v1321, %v1373
        %v1382 = vadd.f32 %v1322, %v1374
        %v1383 = vadd.f32 %v1323, %v1375
        %v1384 = vmul.f32 %v967, %v1326
        %v1385 = vmul.f32 %v969, %v1330
        %v1386 = vmul.f32 %v971, %v1334
        %v1387 = vmul.f32 %v973, %v1338
        %v1388 = vmul.f32 %v975, %v1342
        %v1389 = vmul.f32 %v977, %v1346
        %v1390 = vmul.f32 %v979, %v1350
        %v1391 = vmul.f32 %v965, %v1354
        %v1392 = vlaneseq
        %v1393 = vshrl.u32 %v1392, 7
        %v1394 = vsub.s32 7, %v1393
        %v1395 = vrot.slane %v954, %v1394
        %v1396 = vmul.f32 %v1384, %v1395
        %v1397 = vmul.f32 %v1385, %v1395
        %v1398 = vmul.f32 %v1386, %v1395
        %v1399 = vmul.f32 %v1387, %v1395
        %v1400 = vmul.f32 %v1388, %v1395
        %v1401 = vmul.f32 %v1389, %v1395
        %v1402 = vmul.f32 %v1390, %v1395
        %v1403 = vmul.f32 %v1391, %v1395
        %v1404 = vadd.f32 %v1376, %v1396
        %v1405 = vadd.f32 %v1377, %v1397
        %v1406 = vadd.f32 %v1378, %v1398
        %v1407 = vadd.f32 %v1379, %v1399
        %v1408 = vadd.f32 %v1380, %v1400
        %v1409 = vadd.f32 %v1381, %v1401
        %v1410 = vadd.f32 %v1382, %v1402
        %v1411 = vadd.f32 %v1383, %v1403
        %v1412 = vmul.f32 %v1105, %v1326
        %v1413 = vmul.f32 %v1106, %v1330
        %v1414 = vmul.f32 %v1107, %v1334
        %v1415 = vmul.f32 %v1108, %v1338
        %v1416 = vmul.f32 %v1109, %v1342
        %v1417 = vmul.f32 %v1110, %v1346
        %v1418 = vmul.f32 %v1111, %v1350
        %v1419 = vmul.f32 %v1104, %v1354
        %v1420 = vlaneseq
        %v1421 = vshrl.u32 %v1420, 7
        %v1422 = vsub.s32 0, %v1421
        %v1423 = vrot.slane %v955, %v1422
        %v1424 = vmul.f32 %v1412, %v1423
        %v1425 = vmul.f32 %v1413, %v1423
        %v1426 = vmul.f32 %v1414, %v1423
        %v1427 = vmul.f32 %v1415, %v1423
        %v1428 = vmul.f32 %v1416, %v1423
        %v1429 = vmul.f32 %v1417, %v1423
        %v1430 = vmul.f32 %v1418, %v1423
        %v1431 = vmul.f32 %v1419, %v1423
        %v1432 = vadd.f32 %v1404, %v1424
        %v1433 = vadd.f32 %v1405, %v1425
        %v1434 = vadd.f32 %v1406, %v1426
        %v1435 = vadd.f32 %v1407, %v1427
        %v1436 = vadd.f32 %v1408, %v1428
        %v1437 = vadd.f32 %v1409, %v1429
        %v1438 = vadd.f32 %v1410, %v1430
        %v1439 = vadd.f32 %v1411, %v1431
        %v1440 = vld [vmem:[%s7] sm:$0x1]
        %v1442 = vlaneseq
        %v1443 = vshrl.u32 %v1442, 7
        %v1444 = vsub.s32 0, %v1443
        %v1445 = vrot.slane %v1440, %v1444
        %v1447 = vadd.f32 %v1432, %v1445
        %v1448 = vadd.f32 %v1433, %v1445
        %v1449 = vadd.f32 %v1434, %v1445
        %v1450 = vadd.f32 %v1435, %v1445
        %v1451 = vadd.f32 %v1436, %v1445
        %v1452 = vadd.f32 %v1437, %v1445
        %v1453 = vadd.f32 %v1438, %v1445
        %v1454 = vadd.f32 %v1439, %v1445
        %v1455 = vpack.c.bf16 %v919, %v916
        %v1456 = vpack.c.bf16 %v927, %v924
        %v1457 = vpack.c.bf16 %v935, %v932
        %v1458 = vpack.c.bf16 %v943, %v940
        %1463 = vrot.lane.b32.xlu0 %v1455, 96
        %v1464 = vpop.permute.xlu0 %1463
        %1465 = vrot.lane.b32.xlu0 %v1456, 96
        %v1466 = vpop.permute.xlu0 %1465
        %1467 = vrot.lane.b32.xlu0 %v1457, 96
        %v1468 = vpop.permute.xlu0 %1467
        %1469 = vrot.lane.b32.xlu0 %v1458, 96
        %v1470 = vpop.permute.xlu0 %1469
        %vm1471 = vcmask 261120
        %v1473 = vsel %vm1471, %v1455, 0
        %v1476 = vsel %vm1471, %v1456, 0
        %v1479 = vsel %vm1471, %v1457, 0
        %v1482 = vsel %vm1471, %v1458, 0
        %v1485 = vsel %vm1471, %v1464, 0
        %v1488 = vsel %vm1471, %v1466, 0
        %v1491 = vsel %vm1471, %v1468, 0
        %v1494 = vsel %vm1471, %v1470, 0
        %1496 = vmatprep.subr.bf16.mxu0 0
        %1497 = vmatpush1.bf16.xpose.msra.mxu0 0
        %1498 = vmatprep.subr.bf16.mxu0 0
        %1499 = vmatpush1.bf16.xpose.msra.mxu0 0
        %1500 = vmatprep.subr.bf16.mxu0 0
        %1501 = vmatpush1.bf16.xpose.msra.mxu0 0
        %1502 = vmatprep.subr.bf16.mxu0 0
        %1503 = vmatpush1.bf16.xpose.msra.mxu0 0
        %1504 = vmatprep.subr.bf16.mxu0 0
        %1505 = vmatpush1.bf16.xpose.msra.mxu0 %v1494
        %1506 = vmatprep.subr.bf16.mxu0 0
        %1507 = vmatpush1.bf16.xpose.msra.mxu0 %v1491
        %1508 = vmatprep.subr.bf16.mxu0 0
        %1509 = vmatpush1.bf16.xpose.msra.mxu0 %v1488
        %1510 = vmatprep.subr.bf16.mxu0 0
        %1511 = vmatpush1.bf16.xpose.msra.mxu0 %v1485
        %1512 = vmatprep.subr.bf16.mxu0 0
        %1513 = vmatpush2.bf16.xpose.msra.mxu0 0
        %1514 = vmatprep.subr.bf16.mxu0 0
        %1515 = vmatpush2.bf16.xpose.msra.mxu0 0
        %1516 = vmatprep.subr.bf16.mxu0 0
        %1517 = vmatpush2.bf16.xpose.msra.mxu0 0
        %1518 = vmatprep.subr.bf16.mxu0 0
        %1519 = vmatpush2.bf16.xpose.msra.mxu0 0
        %1520 = vmatprep.subr.bf16.mxu0 0
        %1521 = vmatpush2.bf16.xpose.msra.mxu0 0
        %1522 = vmatprep.subr.bf16.mxu0 0
        %1523 = vmatpush2.bf16.xpose.msra.mxu0 0
        %1524 = vmatprep.subr.bf16.mxu0 0
        %1525 = vmatpush2.bf16.xpose.msra.mxu0 0
        %1526 = vmatprep.subr.bf16.mxu0 0
        %1527 = vmatpush2.bf16.xpose.msra.mxu0 0
        %1528 = vmatprep.mubr.bf16.mxu0 0
        %1529 = vmatmul.mubr.bf16.gmra.mxu0 %v1473
        %v1530 = vpop.f32.mrf.mxu0
        %v1531 = vadd.f32 0.0, %v1530
        %v1532 = vpop.f32.mrf.mxu0
        %v1533 = vpop.f32.mrf.mxu0
        %v1534 = vadd.f32 0.0, %v1533
        %v1535 = vpop.f32.mrf.mxu0
        %1536 = vmatprep.mubr.bf16.mxu0 0
        %1537 = vmatmul.mubr.bf16.gmra.mxu0 %v1476
        %v1538 = vpop.f32.mrf.mxu0
        %v1539 = vadd.f32 0.0, %v1538
        %v1540 = vpop.f32.mrf.mxu0
        %v1541 = vpop.f32.mrf.mxu0
        %v1542 = vadd.f32 0.0, %v1541
        %v1543 = vpop.f32.mrf.mxu0
        %1544 = vmatprep.mubr.bf16.mxu0 0
        %1545 = vmatmul.mubr.bf16.gmra.mxu0 %v1479
        %v1546 = vpop.f32.mrf.mxu0
        %v1547 = vadd.f32 0.0, %v1546
        %v1548 = vpop.f32.mrf.mxu0
        %v1549 = vpop.f32.mrf.mxu0
        %v1550 = vadd.f32 0.0, %v1549
        %v1551 = vpop.f32.mrf.mxu0
        %1552 = vmatprep.mubr.bf16.mxu0 0
        %1553 = vmatmul.mubr.bf16.gmra.mxu0 %v1482
        %v1554 = vpop.f32.mrf.mxu0
        %v1555 = vadd.f32 0.0, %v1554
        %v1556 = vpop.f32.mrf.mxu0
        %v1557 = vpop.f32.mrf.mxu0
        %v1558 = vadd.f32 0.0, %v1557
        %v1559 = vpop.f32.mrf.mxu0
        %1560 = vdwg.mxu0
        %v1561 = vmul.f32 %v1531, 0.17677669
        %v1562 = vmul.f32 %v1534, 0.17677669
        %v1563 = vmul.f32 %v1539, 0.17677669
        %v1564 = vmul.f32 %v1542, 0.17677669
        %v1565 = vmul.f32 %v1547, 0.17677669
        %v1566 = vmul.f32 %v1550, 0.17677669
        %v1567 = vmul.f32 %v1555, 0.17677669
        %v1568 = vmul.f32 %v1558, 0.17677669
        %v1569 = vsel %vm868, %v1561, -inf
        %1570 = vmax.xlane.f32.xlu0 %v1569
        %v1571 = vpop.xlane.xlu0 %1570
        %v1572 = vsel %vm868, %v1562, -inf
        %1573 = vmax.xlane.f32.xlu0 %v1572
        %v1574 = vpop.xlane.xlu0 %1573
        %v1575 = vsel %vm868, %v1563, -inf
        %1576 = vmax.xlane.f32.xlu0 %v1575
        %v1577 = vpop.xlane.xlu0 %1576
        %v1578 = vsel %vm868, %v1564, -inf
        %1579 = vmax.xlane.f32.xlu0 %v1578
        %v1580 = vpop.xlane.xlu0 %1579
        %v1581 = vsel %vm868, %v1565, -inf
        %1582 = vmax.xlane.f32.xlu0 %v1581
        %v1583 = vpop.xlane.xlu0 %1582
        %v1584 = vsel %vm868, %v1566, -inf
        %1585 = vmax.xlane.f32.xlu0 %v1584
        %v1586 = vpop.xlane.xlu0 %1585
        %v1587 = vsel %vm868, %v1567, -inf
        %1588 = vmax.xlane.f32.xlu0 %v1587
        %v1589 = vpop.xlane.xlu0 %1588
        %v1590 = vsel %vm868, %v1568, -inf
        %1591 = vmax.xlane.f32.xlu0 %v1590
        %v1592 = vpop.xlane.xlu0 %1591
        %v1593 = vsub.f32 %v1561, %v1571
        %v1594 = vsub.f32 %v1562, %v1574
        %v1595 = vsub.f32 %v1563, %v1577
        %v1596 = vsub.f32 %v1564, %v1580
        %v1597 = vsub.f32 %v1565, %v1583
        %v1598 = vsub.f32 %v1566, %v1586
        %v1599 = vsub.f32 %v1567, %v1589
        %v1600 = vsub.f32 %v1568, %v1592
        %v1601 = vmul.f32 %v1593, 1.442695
        %v1602 = vpow.pop %v1601
        %v1603 = vmul.f32 %v1594, 1.442695
        %v1604 = vpow.pop %v1603
        %v1605 = vmul.f32 %v1595, 1.442695
        %v1606 = vpow.pop %v1605
        %v1607 = vmul.f32 %v1596, 1.442695
        %v1608 = vpow.pop %v1607
        %v1609 = vmul.f32 %v1597, 1.442695
        %v1610 = vpow.pop %v1609
        %v1611 = vmul.f32 %v1598, 1.442695
        %v1612 = vpow.pop %v1611
        %v1613 = vmul.f32 %v1599, 1.442695
        %v1614 = vpow.pop %v1613
        %v1615 = vmul.f32 %v1600, 1.442695
        %v1616 = vpow.pop %v1615
        %v1617 = vsel %vm868, %v1602, 0.0
        %1618 = vadd.xlane.f32.xlu0 %v1617
        %v1619 = vpop.xlane.xlu0 %1618
        %v1620 = vsel %vm868, %v1604, 0.0
        %1621 = vadd.xlane.f32.xlu0 %v1620
        %v1622 = vpop.xlane.xlu0 %1621
        %v1623 = vsel %vm868, %v1606, 0.0
        %1624 = vadd.xlane.f32.xlu0 %v1623
        %v1625 = vpop.xlane.xlu0 %1624
        %v1626 = vsel %vm868, %v1608, 0.0
        %1627 = vadd.xlane.f32.xlu0 %v1626
        %v1628 = vpop.xlane.xlu0 %1627
        %v1629 = vsel %vm868, %v1610, 0.0
        %1630 = vadd.xlane.f32.xlu0 %v1629
        %v1631 = vpop.xlane.xlu0 %1630
        %v1632 = vsel %vm868, %v1612, 0.0
        %1633 = vadd.xlane.f32.xlu0 %v1632
        %v1634 = vpop.xlane.xlu0 %1633
        %v1635 = vsel %vm868, %v1614, 0.0
        %1636 = vadd.xlane.f32.xlu0 %v1635
        %v1637 = vpop.xlane.xlu0 %1636
        %v1638 = vsel %vm868, %v1616, 0.0
        %1639 = vadd.xlane.f32.xlu0 %v1638
        %v1640 = vpop.xlane.xlu0 %1639
        %v1641 = vrcp.pop %v1619
        %v1642 = vrcp.pop %v1622
        %v1643 = vrcp.pop %v1625
        %v1644 = vrcp.pop %v1628
        %v1645 = vrcp.pop %v1631
        %v1646 = vrcp.pop %v1634
        %v1647 = vrcp.pop %v1637
        %v1648 = vrcp.pop %v1640
        %v1649 = vmul.f32 %v1602, %v1641
        %v1650 = vmul.f32 %v1604, %v1642
        %v1651 = vmul.f32 %v1606, %v1643
        %v1652 = vmul.f32 %v1608, %v1644
        %v1653 = vmul.f32 %v1610, %v1645
        %v1654 = vmul.f32 %v1612, %v1646
        %v1655 = vmul.f32 %v1614, %v1647
        %v1656 = vmul.f32 %v1616, %v1648
        %v1657 = vpack.c.bf16 %v1650, %v1649
        %v1658 = vpack.c.bf16 %v1652, %v1651
        %v1659 = vpack.c.bf16 %v1654, %v1653
        %v1660 = vpack.c.bf16 %v1656, %v1655
        %1661 = vrot.lane.b32.xlu0 %v1455, 64
        %v1662 = vpop.permute.xlu0 %1661
        %1663 = vrot.lane.b32.xlu0 %v1456, 64
        %v1664 = vpop.permute.xlu0 %1663
        %1665 = vrot.lane.b32.xlu0 %v1457, 64
        %v1666 = vpop.permute.xlu0 %1665
        %1667 = vrot.lane.b32.xlu0 %v1458, 64
        %v1668 = vpop.permute.xlu0 %1667
        %v1674 = vsel %vm868, %v1657, 0
        %v1677 = vsel %vm868, %v1658, 0
        %v1680 = vsel %vm868, %v1659, 0
        %v1683 = vsel %vm868, %v1660, 0
        %1685 = vmatprep.subr.bf16.mxu0 0
        %1686 = vmatpush1.bf16.msra.mxu0 0
        %1687 = vmatprep.subr.bf16.mxu0 0
        %1688 = vmatpush1.bf16.msra.mxu0 0
        %1689 = vmatprep.subr.bf16.mxu0 0
        %1690 = vmatpush1.bf16.msra.mxu0 0
        %1691 = vmatprep.subr.bf16.mxu0 0
        %1692 = vmatpush1.bf16.msra.mxu0 0
        %1693 = vmatprep.subr.bf16.mxu0 0
        %1694 = vmatpush1.bf16.msra.mxu0 %v1668
        %1695 = vmatprep.subr.bf16.mxu0 0
        %1696 = vmatpush1.bf16.msra.mxu0 %v1666
        %1697 = vmatprep.subr.bf16.mxu0 0
        %1698 = vmatpush1.bf16.msra.mxu0 %v1664
        %1699 = vmatprep.subr.bf16.mxu0 0
        %1700 = vmatpush1.bf16.msra.mxu0 %v1662
        %1701 = vmatprep.subr.bf16.mxu0 0
        %1702 = vmatpush2.bf16.msra.mxu0 0
        %1703 = vmatprep.subr.bf16.mxu0 0
        %1704 = vmatpush2.bf16.msra.mxu0 0
        %1705 = vmatprep.subr.bf16.mxu0 0
        %1706 = vmatpush2.bf16.msra.mxu0 0
        %1707 = vmatprep.subr.bf16.mxu0 0
        %1708 = vmatpush2.bf16.msra.mxu0 0
        %1709 = vmatprep.subr.bf16.mxu0 0
        %1710 = vmatpush2.bf16.msra.mxu0 0
        %1711 = vmatprep.subr.bf16.mxu0 0
        %1712 = vmatpush2.bf16.msra.mxu0 0
        %1713 = vmatprep.subr.bf16.mxu0 0
        %1714 = vmatpush2.bf16.msra.mxu0 0
        %1715 = vmatprep.subr.bf16.mxu0 0
        %1716 = vmatpush2.bf16.msra.mxu0 0
        %1717 = vmatprep.mubr.bf16.mxu0 0
        %1718 = vmatmul.mubr.bf16.gmra.mxu0 %v1674
        %v1719 = vpop.f32.mrf.mxu0
        %v1720 = vadd.f32 %v1447, %v1719
        %v1721 = vpop.f32.mrf.mxu0
        %v1722 = vpop.f32.mrf.mxu0
        %v1723 = vadd.f32 %v1448, %v1722
        %v1724 = vpop.f32.mrf.mxu0
        %1725 = vmatprep.mubr.bf16.mxu0 0
        %1726 = vmatmul.mubr.bf16.gmra.mxu0 %v1677
        %v1727 = vpop.f32.mrf.mxu0
        %v1728 = vadd.f32 %v1449, %v1727
        %v1729 = vpop.f32.mrf.mxu0
        %v1730 = vpop.f32.mrf.mxu0
        %v1731 = vadd.f32 %v1450, %v1730
        %v1732 = vpop.f32.mrf.mxu0
        %1733 = vmatprep.mubr.bf16.mxu0 0
        %1734 = vmatmul.mubr.bf16.gmra.mxu0 %v1680
        %v1735 = vpop.f32.mrf.mxu0
        %v1736 = vadd.f32 %v1451, %v1735
        %v1737 = vpop.f32.mrf.mxu0
        %v1738 = vpop.f32.mrf.mxu0
        %v1739 = vadd.f32 %v1452, %v1738
        %v1740 = vpop.f32.mrf.mxu0
        %1741 = vmatprep.mubr.bf16.mxu0 0
        %1742 = vmatmul.mubr.bf16.gmra.mxu0 %v1683
        %v1743 = vpop.f32.mrf.mxu0
        %v1744 = vadd.f32 %v1453, %v1743
        %v1745 = vpop.f32.mrf.mxu0
        %v1746 = vpop.f32.mrf.mxu0
        %v1747 = vadd.f32 %v1454, %v1746
        %v1748 = vpop.f32.mrf.mxu0
        %1749 = vdwg.mxu0
        %v1750 = vld [vmem:[#allocation8] sm:$0xf]
        %v1751 = vld [vmem:[#allocation8 + $0x4] sm:$0xf]
        %v1752 = vld [vmem:[#allocation8 + $0x8] sm:$0xf]
        %v1753 = vld [vmem:[#allocation8 + $0xc] sm:$0xf]
        %v1754 = vld [vmem:[#allocation8 + $0x10] sm:$0xf]
        %v1755 = vld [vmem:[#allocation8 + $0x14] sm:$0xf]
        %v1756 = vld [vmem:[#allocation8 + $0x18] sm:$0xf]
        %v1757 = vld [vmem:[#allocation8 + $0x1c] sm:$0xf]
        %v1758 = vpack.c.bf16 %v1723, %v1720
        %v1759 = vpack.c.bf16 %v1731, %v1728
        %v1760 = vpack.c.bf16 %v1739, %v1736
        %v1761 = vpack.c.bf16 %v1747, %v1744
        %v1770 = vunpack.c.l.b16 %v1750
        %v1771 = vunpack.c.l.b16 %v1751
        %v1772 = vunpack.c.l.b16 %v1752
        %v1773 = vunpack.c.l.b16 %v1753
        %v1774 = vunpack.c.l.b16 %v1754
        %v1775 = vunpack.c.l.b16 %v1755
        %v1776 = vunpack.c.l.b16 %v1756
        %v1777 = vunpack.c.l.b16 %v1757
        %v1778 = vpack.c.b16 %v1771, %v1770
        %v1779 = vpack.c.b16 %v1773, %v1772
        %v1780 = vpack.c.b16 %v1775, %v1774
        %v1781 = vpack.c.b16 %v1777, %v1776
        %v1787 = vsel %vm868, %v1758, 0
        %v1790 = vsel %vm868, %v1759, 0
        %v1793 = vsel %vm868, %v1760, 0
        %v1796 = vsel %vm868, %v1761, 0
        %1798 = vmatprep.subr.bf16.mxu0 0
        %1799 = vmatpush1.bf16.msra.mxu0 0
        %1800 = vmatprep.subr.bf16.mxu0 0
        %1801 = vmatpush1.bf16.msra.mxu0 0
        %1802 = vmatprep.subr.bf16.mxu0 0
        %1803 = vmatpush1.bf16.msra.mxu0 0
        %1804 = vmatprep.subr.bf16.mxu0 0
        %1805 = vmatpush1.bf16.msra.mxu0 0
        %1806 = vmatprep.subr.bf16.mxu0 0
        %1807 = vmatpush1.bf16.msra.mxu0 %v1781
        %1808 = vmatprep.subr.bf16.mxu0 0
        %1809 = vmatpush1.bf16.msra.mxu0 %v1780
        %1810 = vmatprep.subr.bf16.mxu0 0
        %1811 = vmatpush1.bf16.msra.mxu0 %v1779
        %1812 = vmatprep.subr.bf16.mxu0 0
        %1813 = vmatpush1.bf16.msra.mxu0 %v1778
        %1814 = vmatprep.subr.bf16.mxu0 0
        %1815 = vmatpush2.bf16.msra.mxu0 0
        %1816 = vmatprep.subr.bf16.mxu0 0
        %1817 = vmatpush2.bf16.msra.mxu0 0
        %1818 = vmatprep.subr.bf16.mxu0 0
        %1819 = vmatpush2.bf16.msra.mxu0 0
        %1820 = vmatprep.subr.bf16.mxu0 0
        %1821 = vmatpush2.bf16.msra.mxu0 0
        %1822 = vmatprep.subr.bf16.mxu0 0
        %1823 = vmatpush2.bf16.msra.mxu0 0
        %1824 = vmatprep.subr.bf16.mxu0 0
        %1825 = vmatpush2.bf16.msra.mxu0 0
        %1826 = vmatprep.subr.bf16.mxu0 0
        %1827 = vmatpush2.bf16.msra.mxu0 0
        %1828 = vmatprep.subr.bf16.mxu0 0
        %1829 = vmatpush2.bf16.msra.mxu0 0
        %1830 = vmatprep.mubr.bf16.mxu0 0
        %1831 = vmatmul.mubr.bf16.gmra.mxu0 %v1787
        %v1832 = vpop.f32.mrf.mxu0
        %v1833 = vadd.f32 0.0, %v1832
        %v1834 = vpop.f32.mrf.mxu0
        %v1835 = vpop.f32.mrf.mxu0
        %v1836 = vadd.f32 0.0, %v1835
        %v1837 = vpop.f32.mrf.mxu0
        %1838 = vmatprep.mubr.bf16.mxu0 0
        %1839 = vmatmul.mubr.bf16.gmra.mxu0 %v1790
        %v1840 = vpop.f32.mrf.mxu0
        %v1841 = vadd.f32 0.0, %v1840
        %v1842 = vpop.f32.mrf.mxu0
        %v1843 = vpop.f32.mrf.mxu0
        %v1844 = vadd.f32 0.0, %v1843
        %v1845 = vpop.f32.mrf.mxu0
        %1846 = vmatprep.mubr.bf16.mxu0 0
        %1847 = vmatmul.mubr.bf16.gmra.mxu0 %v1793
        %v1848 = vpop.f32.mrf.mxu0
        %v1849 = vadd.f32 0.0, %v1848
        %v1850 = vpop.f32.mrf.mxu0
        %v1851 = vpop.f32.mrf.mxu0
        %v1852 = vadd.f32 0.0, %v1851
        %v1853 = vpop.f32.mrf.mxu0
        %1854 = vmatprep.mubr.bf16.mxu0 0
        %1855 = vmatmul.mubr.bf16.gmra.mxu0 %v1796
        %v1856 = vpop.f32.mrf.mxu0
        %v1857 = vadd.f32 0.0, %v1856
        %v1858 = vpop.f32.mrf.mxu0
        %v1859 = vpop.f32.mrf.mxu0
        %v1860 = vadd.f32 0.0, %v1859
        %v1861 = vpop.f32.mrf.mxu0
        %1862 = vdwg.mxu0
        %1871 = vrot.lane.b32.xlu0 %v1833, 64
        %v1872 = vpop.permute.xlu0 %1871
        %1873 = vrot.lane.b32.xlu0 %v1836, 64
        %v1874 = vpop.permute.xlu0 %1873
        %1875 = vrot.lane.b32.xlu0 %v1841, 64
        %v1876 = vpop.permute.xlu0 %1875
        %1877 = vrot.lane.b32.xlu0 %v1844, 64
        %v1878 = vpop.permute.xlu0 %1877
        %1879 = vrot.lane.b32.xlu0 %v1849, 64
        %v1880 = vpop.permute.xlu0 %1879
        %1881 = vrot.lane.b32.xlu0 %v1852, 64
        %v1882 = vpop.permute.xlu0 %1881
        %1883 = vrot.lane.b32.xlu0 %v1857, 64
        %v1884 = vpop.permute.xlu0 %1883
        %1885 = vrot.lane.b32.xlu0 %v1860, 64
        %v1886 = vpop.permute.xlu0 %1885
        %v1895 = vadd.f32 %v805, %v1872
        %v1896 = vadd.f32 %v806, %v1874
        %v1897 = vadd.f32 %v807, %v1876
        %v1898 = vadd.f32 %v808, %v1878
        %v1899 = vadd.f32 %v809, %v1880
        %v1900 = vadd.f32 %v810, %v1882
        %v1901 = vadd.f32 %v811, %v1884
        %v1902 = vadd.f32 %v812, %v1886
        %v1903 = vld [vmem:[%s9] sm:$0x1]
        %v1905 = vlaneseq
        %v1906 = vshrl.u32 %v1905, 7
        %v1907 = vsub.s32 0, %v1906
        %v1908 = vrot.slane %v1903, %v1907
        %1909 = vrot.lane.b32.xlu0 %v1908, 64
        %v1910 = vpop.permute.xlu0 %1909
        %v1912 = vadd.f32 %v1895, %v1910
        %v1913 = vadd.f32 %v1896, %v1910
        %v1914 = vadd.f32 %v1897, %v1910
        %v1915 = vadd.f32 %v1898, %v1910
        %v1916 = vadd.f32 %v1899, %v1910
        %v1917 = vadd.f32 %v1900, %v1910
        %v1918 = vadd.f32 %v1901, %v1910
        %v1919 = vadd.f32 %v1902, %v1910
        %v1920 = vpack.c.bf16 %v1913, %v1912
        %v1921 = vpack.c.bf16 %v1915, %v1914
        %v1922 = vpack.c.bf16 %v1917, %v1916
        %v1923 = vpack.c.bf16 %v1919, %v1918
        %v1924 = vld [vmem:[#allocation10] sm:$0xf]
        %v1925 = vld [vmem:[#allocation10 + $0x4] sm:$0xf]
        %v1926 = vld [vmem:[#allocation10 + $0x8] sm:$0xf]
        %v1927 = vld [vmem:[#allocation10 + $0xc] sm:$0xf]
        %v1928 = vld [vmem:[#allocation10 + $0x10] sm:$0xf]
        %v1929 = vld [vmem:[#allocation10 + $0x14] sm:$0xf]
        %v1930 = vld [vmem:[#allocation10 + $0x18] sm:$0xf]
        %v1931 = vld [vmem:[#allocation10 + $0x1c] sm:$0xf]
        %v1932 = vld [vmem:[%s11] sm:$0x1]
        %v1934 = vlaneseq
        %v1935 = vshrl.u32 %v1934, 7
        %v1936 = vsub.s32 0, %v1935
        %v1937 = vrot.slane %v1932, %v1936
        %1943 = vrot.lane.b32.xlu0 %v1920, 64
        %v1944 = vpop.permute.xlu0 %1943
        %1945 = vrot.lane.b32.xlu0 %v1921, 64
        %v1946 = vpop.permute.xlu0 %1945
        %1947 = vrot.lane.b32.xlu0 %v1922, 64
        %v1948 = vpop.permute.xlu0 %1947
        %1949 = vrot.lane.b32.xlu0 %v1923, 64
        %v1950 = vpop.permute.xlu0 %1949
        %v1959 = vunpack.c.l.b16 %v1924
        %v1960 = vunpack.c.l.b16 %v1925
        %v1961 = vunpack.c.l.b16 %v1926
        %v1962 = vunpack.c.l.b16 %v1927
        %v1963 = vunpack.c.l.b16 %v1928
        %v1964 = vunpack.c.l.b16 %v1929
        %v1965 = vunpack.c.l.b16 %v1930
        %v1966 = vunpack.c.l.b16 %v1931
        %v1967 = vpack.c.b16 %v1960, %v1959
        %v1968 = vpack.c.b16 %v1962, %v1961
        %v1969 = vpack.c.b16 %v1964, %v1963
        %v1970 = vpack.c.b16 %v1966, %v1965
        %v1976 = vsel %vm868, %v1944, 0
        %v1979 = vsel %vm868, %v1946, 0
        %v1982 = vsel %vm868, %v1948, 0
        %v1985 = vsel %vm868, %v1950, 0
        %1987 = vmatprep.subr.bf16.mxu0 0
        %1988 = vmatpush1.bf16.msra.mxu0 0
        %1989 = vmatprep.subr.bf16.mxu0 0
        %1990 = vmatpush1.bf16.msra.mxu0 0
        %1991 = vmatprep.subr.bf16.mxu0 0
        %1992 = vmatpush1.bf16.msra.mxu0 0
        %1993 = vmatprep.subr.bf16.mxu0 0
        %1994 = vmatpush1.bf16.msra.mxu0 0
        %1995 = vmatprep.subr.bf16.mxu0 0
        %1996 = vmatpush1.bf16.msra.mxu0 %v1970
        %1997 = vmatprep.subr.bf16.mxu0 0
        %1998 = vmatpush1.bf16.msra.mxu0 %v1969
        %1999 = vmatprep.subr.bf16.mxu0 0
        %2000 = vmatpush1.bf16.msra.mxu0 %v1968
        %2001 = vmatprep.subr.bf16.mxu0 0
        %2002 = vmatpush1.bf16.msra.mxu0 %v1967
        %2003 = vmatprep.subr.bf16.mxu0 0
        %2004 = vmatpush2.bf16.msra.mxu0 0
        %2005 = vmatprep.subr.bf16.mxu0 0
        %2006 = vmatpush2.bf16.msra.mxu0 0
        %2007 = vmatprep.subr.bf16.mxu0 0
        %2008 = vmatpush2.bf16.msra.mxu0 0
        %2009 = vmatprep.subr.bf16.mxu0 0
        %2010 = vmatpush2.bf16.msra.mxu0 0
        %2011 = vmatprep.subr.bf16.mxu0 0
        %2012 = vmatpush2.bf16.msra.mxu0 0
        %2013 = vmatprep.subr.bf16.mxu0 0
        %2014 = vmatpush2.bf16.msra.mxu0 0
        %2015 = vmatprep.subr.bf16.mxu0 0
        %2016 = vmatpush2.bf16.msra.mxu0 0
        %2017 = vmatprep.subr.bf16.mxu0 0
        %2018 = vmatpush2.bf16.msra.mxu0 0
        %2019 = vmatprep.mubr.bf16.mxu0 0
        %2020 = vmatmul.mubr.bf16.gmra.mxu0 %v1976
        %v2021 = vpop.f32.mrf.mxu0
        %v2022 = vadd.f32 %v1937, %v2021
        %v2023 = vpop.f32.mrf.mxu0
        %v2024 = vpop.f32.mrf.mxu0
        %v2025 = vadd.f32 %v1937, %v2024
        %v2026 = vpop.f32.mrf.mxu0
        %2027 = vmatprep.mubr.bf16.mxu0 0
        %2028 = vmatmul.mubr.bf16.gmra.mxu0 %v1979
        %v2029 = vpop.f32.mrf.mxu0
        %v2030 = vadd.f32 %v1937, %v2029
        %v2031 = vpop.f32.mrf.mxu0
        %v2032 = vpop.f32.mrf.mxu0
        %v2033 = vadd.f32 %v1937, %v2032
        %v2034 = vpop.f32.mrf.mxu0
        %2035 = vmatprep.mubr.bf16.mxu0 0
        %2036 = vmatmul.mubr.bf16.gmra.mxu0 %v1982
        %v2037 = vpop.f32.mrf.mxu0
        %v2038 = vadd.f32 %v1937, %v2037
        %v2039 = vpop.f32.mrf.mxu0
        %v2040 = vpop.f32.mrf.mxu0
        %v2041 = vadd.f32 %v1937, %v2040
        %v2042 = vpop.f32.mrf.mxu0
        %2043 = vmatprep.mubr.bf16.mxu0 0
        %2044 = vmatmul.mubr.bf16.gmra.mxu0 %v1985
        %v2045 = vpop.f32.mrf.mxu0
        %v2046 = vadd.f32 %v1937, %v2045
        %v2047 = vpop.f32.mrf.mxu0
        %v2048 = vpop.f32.mrf.mxu0
        %v2049 = vadd.f32 %v1937, %v2048
        %v2050 = vpop.f32.mrf.mxu0
        %2051 = vdwg.mxu0
        %v2052 = vxor.u32 %v2022, 2147483648
        %v2053 = vxor.u32 %v2025, 2147483648
        %v2054 = vxor.u32 %v2030, 2147483648
        %v2055 = vxor.u32 %v2033, 2147483648
        %v2056 = vxor.u32 %v2038, 2147483648
        %v2057 = vxor.u32 %v2041, 2147483648
        %v2058 = vxor.u32 %v2046, 2147483648
        %v2059 = vxor.u32 %v2049, 2147483648
        %v2060 = vmul.f32 %v2052, 1.442695
        %v2061 = vpow.pop %v2060
        %v2062 = vmul.f32 %v2053, 1.442695
        %v2063 = vpow.pop %v2062
        %v2064 = vmul.f32 %v2054, 1.442695
        %v2065 = vpow.pop %v2064
        %v2066 = vmul.f32 %v2055, 1.442695
        %v2067 = vpow.pop %v2066
        %v2068 = vmul.f32 %v2056, 1.442695
        %v2069 = vpow.pop %v2068
        %v2070 = vmul.f32 %v2057, 1.442695
        %v2071 = vpow.pop %v2070
        %v2072 = vmul.f32 %v2058, 1.442695
        %v2073 = vpow.pop %v2072
        %v2074 = vmul.f32 %v2059, 1.442695
        %v2075 = vpow.pop %v2074
        %v2076 = vadd.f32 %v2061, 1.0
        %v2077 = vadd.f32 %v2063, 1.0
        %v2078 = vadd.f32 %v2065, 1.0
        %v2079 = vadd.f32 %v2067, 1.0
        %v2080 = vadd.f32 %v2069, 1.0
        %v2081 = vadd.f32 %v2071, 1.0
        %v2082 = vadd.f32 %v2073, 1.0
        %v2083 = vadd.f32 %v2075, 1.0
        %v2084 = vrcp.pop %v2076
        %v2085 = vmul.f32 1.0, %v2084
        %v2086 = vrcp.pop %v2077
        %v2087 = vmul.f32 1.0, %v2086
        %v2088 = vrcp.pop %v2078
        %v2089 = vmul.f32 1.0, %v2088
        %v2090 = vrcp.pop %v2079
        %v2091 = vmul.f32 1.0, %v2090
        %v2092 = vrcp.pop %v2080
        %v2093 = vmul.f32 1.0, %v2092
        %v2094 = vrcp.pop %v2081
        %v2095 = vmul.f32 1.0, %v2094
        %v2096 = vrcp.pop %v2082
        %v2097 = vmul.f32 1.0, %v2096
        %v2098 = vrcp.pop %v2083
        %v2099 = vmul.f32 1.0, %v2098
        %v2100 = vmul.f32 %v2022, %v2085
        %v2101 = vmul.f32 %v2025, %v2087
        %v2102 = vmul.f32 %v2030, %v2089
        %v2103 = vmul.f32 %v2033, %v2091
        %v2104 = vmul.f32 %v2038, %v2093
        %v2105 = vmul.f32 %v2041, %v2095
        %v2106 = vmul.f32 %v2046, %v2097
        %v2107 = vmul.f32 %v2049, %v2099
        %v2108 = vpack.c.bf16 %v2101, %v2100
        %v2109 = vpack.c.bf16 %v2103, %v2102
        %v2110 = vpack.c.bf16 %v2105, %v2104
        %v2111 = vpack.c.bf16 %v2107, %v2106
        %v2112 = vld [vmem:[%s12] sm:$0xf]
        %v2113 = vld [vmem:[%s12 + $0x4] sm:$0xf]
        %v2114 = vld [vmem:[%s12 + $0x8] sm:$0xf]
        %v2115 = vld [vmem:[%s12 + $0xc] sm:$0xf]
        %v2116 = vld [vmem:[%s12 + $0x10] sm:$0xf]
        %v2117 = vld [vmem:[%s12 + $0x14] sm:$0xf]
        %v2118 = vld [vmem:[%s12 + $0x18] sm:$0xf]
        %v2119 = vld [vmem:[%s12 + $0x1c] sm:$0xf]
        %v2120 = vld [vmem:[%s12 + $0x20] sm:$0xf]
        %v2121 = vld [vmem:[%s12 + $0x24] sm:$0xf]
        %v2122 = vld [vmem:[%s12 + $0x28] sm:$0xf]
        %v2123 = vld [vmem:[%s12 + $0x2c] sm:$0xf]
        %v2124 = vld [vmem:[%s12 + $0x30] sm:$0xf]
        %v2125 = vld [vmem:[%s12 + $0x34] sm:$0xf]
        %v2126 = vld [vmem:[%s12 + $0x38] sm:$0xf]
        %v2127 = vld [vmem:[%s12 + $0x3c] sm:$0xf]
        %v2128 = vld [vmem:[%s13] sm:$0x1]
        %v2130 = vlaneseq
        %v2131 = vshrl.u32 %v2130, 7
        %v2132 = vsub.s32 0, %v2131
        %v2133 = vrot.slane %v2128, %v2132
        %v2151 = vunpack.c.l.b16 %v2112
        %v2152 = vunpack.c.l.b16 %v2113
        %v2153 = vunpack.c.l.b16 %v2114
        %v2154 = vunpack.c.l.b16 %v2115
        %v2155 = vunpack.c.l.b16 %v2116
        %v2156 = vunpack.c.l.b16 %v2117
        %v2157 = vunpack.c.l.b16 %v2118
        %v2158 = vunpack.c.l.b16 %v2119
        %v2159 = vunpack.c.l.b16 %v2120
        %v2160 = vunpack.c.l.b16 %v2121
        %v2161 = vunpack.c.l.b16 %v2122
        %v2162 = vunpack.c.l.b16 %v2123
        %v2163 = vunpack.c.l.b16 %v2124
        %v2164 = vunpack.c.l.b16 %v2125
        %v2165 = vunpack.c.l.b16 %v2126
        %v2166 = vunpack.c.l.b16 %v2127
        %v2167 = vpack.c.b16 %v2152, %v2151
        %v2168 = vpack.c.b16 %v2154, %v2153
        %v2169 = vpack.c.b16 %v2156, %v2155
        %v2170 = vpack.c.b16 %v2158, %v2157
        %v2171 = vpack.c.b16 %v2160, %v2159
        %v2172 = vpack.c.b16 %v2162, %v2161
        %v2173 = vpack.c.b16 %v2164, %v2163
        %v2174 = vpack.c.b16 %v2166, %v2165
        %2183 = vmatprep.subr.bf16.mxu0 0
        %2184 = vmatpush1.bf16.msra.mxu0 %v2174
        %2185 = vmatprep.subr.bf16.mxu0 0
        %2186 = vmatpush1.bf16.msra.mxu0 %v2173
        %2187 = vmatprep.subr.bf16.mxu0 0
        %2188 = vmatpush1.bf16.msra.mxu0 %v2172
        %2189 = vmatprep.subr.bf16.mxu0 0
        %2190 = vmatpush1.bf16.msra.mxu0 %v2171
        %2191 = vmatprep.subr.bf16.mxu0 0
        %2192 = vmatpush1.bf16.msra.mxu0 %v2170
        %2193 = vmatprep.subr.bf16.mxu0 0
        %2194 = vmatpush1.bf16.msra.mxu0 %v2169
        %2195 = vmatprep.subr.bf16.mxu0 0
        %2196 = vmatpush1.bf16.msra.mxu0 %v2168
        %2197 = vmatprep.subr.bf16.mxu0 0
        %2198 = vmatpush1.bf16.msra.mxu0 %v2167
        %2199 = vmatprep.subr.bf16.mxu0 0
        %2200 = vmatpush2.bf16.msra.mxu0 0
        %2201 = vmatprep.subr.bf16.mxu0 0
        %2202 = vmatpush2.bf16.msra.mxu0 0
        %2203 = vmatprep.subr.bf16.mxu0 0
        %2204 = vmatpush2.bf16.msra.mxu0 0
        %2205 = vmatprep.subr.bf16.mxu0 0
        %2206 = vmatpush2.bf16.msra.mxu0 0
        %2207 = vmatprep.subr.bf16.mxu0 0
        %2208 = vmatpush2.bf16.msra.mxu0 0
        %2209 = vmatprep.subr.bf16.mxu0 0
        %2210 = vmatpush2.bf16.msra.mxu0 0
        %2211 = vmatprep.subr.bf16.mxu0 0
        %2212 = vmatpush2.bf16.msra.mxu0 0
        %2213 = vmatprep.subr.bf16.mxu0 0
        %2214 = vmatpush2.bf16.msra.mxu0 0
        %2215 = vmatprep.mubr.bf16.mxu0 0
        %2216 = vmatmul.mubr.bf16.gmra.mxu0 %v2108
        %v2217 = vpop.f32.mrf.mxu0
        %v2218 = vadd.f32 %v2133, %v2217
        %v2219 = vpop.f32.mrf.mxu0
        %v2220 = vpop.f32.mrf.mxu0
        %v2221 = vadd.f32 %v2133, %v2220
        %v2222 = vpop.f32.mrf.mxu0
        %2223 = vmatprep.mubr.bf16.mxu0 0
        %2224 = vmatmul.mubr.bf16.gmra.mxu0 %v2109
        %v2225 = vpop.f32.mrf.mxu0
        %v2226 = vadd.f32 %v2133, %v2225
        %v2227 = vpop.f32.mrf.mxu0
        %v2228 = vpop.f32.mrf.mxu0
        %v2229 = vadd.f32 %v2133, %v2228
        %v2230 = vpop.f32.mrf.mxu0
        %2231 = vmatprep.mubr.bf16.mxu0 0
        %2232 = vmatmul.mubr.bf16.gmra.mxu0 %v2110
        %v2233 = vpop.f32.mrf.mxu0
        %v2234 = vadd.f32 %v2133, %v2233
        %v2235 = vpop.f32.mrf.mxu0
        %v2236 = vpop.f32.mrf.mxu0
        %v2237 = vadd.f32 %v2133, %v2236
        %v2238 = vpop.f32.mrf.mxu0
        %2239 = vmatprep.mubr.bf16.mxu0 0
        %2240 = vmatmul.mubr.bf16.gmra.mxu0 %v2111
        %v2241 = vpop.f32.mrf.mxu0
        %v2242 = vadd.f32 %v2133, %v2241
        %v2243 = vpop.f32.mrf.mxu0
        %v2244 = vpop.f32.mrf.mxu0
        %v2245 = vadd.f32 %v2133, %v2244
        %v2246 = vpop.f32.mrf.mxu0
        %2247 = vdwg.mxu0
        %2256 = vrot.lane.b32.xlu0 %v2218, 64
        %v2257 = vpop.permute.xlu0 %2256
        %2258 = vrot.lane.b32.xlu0 %v2221, 64
        %v2259 = vpop.permute.xlu0 %2258
        %2260 = vrot.lane.b32.xlu0 %v2226, 64
        %v2261 = vpop.permute.xlu0 %2260
        %2262 = vrot.lane.b32.xlu0 %v2229, 64
        %v2263 = vpop.permute.xlu0 %2262
        %2264 = vrot.lane.b32.xlu0 %v2234, 64
        %v2265 = vpop.permute.xlu0 %2264
        %2266 = vrot.lane.b32.xlu0 %v2237, 64
        %v2267 = vpop.permute.xlu0 %2266
        %2268 = vrot.lane.b32.xlu0 %v2242, 64
        %v2269 = vpop.permute.xlu0 %2268
        %2270 = vrot.lane.b32.xlu0 %v2245, 64
        %v2271 = vpop.permute.xlu0 %2270
        %v2280 = vadd.f32 %v1912, %v2257
        %v2281 = vadd.f32 %v1913, %v2259
        %v2282 = vadd.f32 %v1914, %v2261
        %v2283 = vadd.f32 %v1915, %v2263
        %v2284 = vadd.f32 %v1916, %v2265
        %v2285 = vadd.f32 %v1917, %v2267
        %v2286 = vadd.f32 %v1918, %v2269
        %v2287 = vadd.f32 %v1919, %v2271
        %v2288 = vld [vmem:[#allocation11] sm:$0xf]
        %v2289 = vld [vmem:[#allocation11 + $0x4] sm:$0xf]
        %v2290 = vld [vmem:[#allocation11 + $0x8] sm:$0xf]
        %v2291 = vld [vmem:[#allocation11 + $0xc] sm:$0xf]
        %v2292 = vld [vmem:[#allocation11 + $0x10] sm:$0xf]
        %v2293 = vld [vmem:[#allocation11 + $0x14] sm:$0xf]
        %v2294 = vld [vmem:[#allocation11 + $0x18] sm:$0xf]
        %v2295 = vld [vmem:[#allocation11 + $0x1c] sm:$0xf]
        %v2296 = vpack.c.bf16 %v2281, %v2280
        %v2297 = vpack.c.bf16 %v2283, %v2282
        %v2298 = vpack.c.bf16 %v2285, %v2284
        %v2299 = vpack.c.bf16 %v2287, %v2286
        %v2300 = vld [vmem:[#allocation11 + $0x20] sm:$0xf]
        %v2301 = vld [vmem:[#allocation11 + $0x24] sm:$0xf]
        %v2302 = vld [vmem:[#allocation11 + $0x28] sm:$0xf]
        %v2303 = vld [vmem:[#allocation11 + $0x2c] sm:$0xf]
        %v2304 = vld [vmem:[#allocation11 + $0x30] sm:$0xf]
        %v2305 = vld [vmem:[#allocation11 + $0x34] sm:$0xf]
        %v2306 = vld [vmem:[#allocation11 + $0x38] sm:$0xf]
        %v2307 = vld [vmem:[#allocation11 + $0x3c] sm:$0xf]
        %2312 = vrot.lane.b32.xlu0 %v2296, 64
        %v2313 = vpop.permute.xlu0 %2312
        %2314 = vrot.lane.b32.xlu0 %v2297, 64
        %v2315 = vpop.permute.xlu0 %2314
        %2316 = vrot.lane.b32.xlu0 %v2298, 64
        %v2317 = vpop.permute.xlu0 %2316
        %2318 = vrot.lane.b32.xlu0 %v2299, 64
        %v2319 = vpop.permute.xlu0 %2318
        %v2328 = vunpack.c.l.b16 %v2300
        %v2329 = vunpack.c.l.b16 %v2301
        %v2330 = vunpack.c.l.b16 %v2302
        %v2331 = vunpack.c.l.b16 %v2303
        %v2332 = vunpack.c.l.b16 %v2304
        %v2333 = vunpack.c.l.b16 %v2305
        %v2334 = vunpack.c.l.b16 %v2306
        %v2335 = vunpack.c.l.b16 %v2307
        %v2336 = vpack.c.b16 %v2329, %v2328
        %v2337 = vpack.c.b16 %v2331, %v2330
        %v2338 = vpack.c.b16 %v2333, %v2332
        %v2339 = vpack.c.b16 %v2335, %v2334
        %v2345 = vsel %vm868, %v2313, 0
        %v2348 = vsel %vm868, %v2315, 0
        %v2351 = vsel %vm868, %v2317, 0
        %v2354 = vsel %vm868, %v2319, 0
        %2356 = vmatprep.subr.bf16.mxu0 0
        %2357 = vmatpush1.bf16.msra.mxu0 0
        %2358 = vmatprep.subr.bf16.mxu0 0
        %2359 = vmatpush1.bf16.msra.mxu0 0
        %2360 = vmatprep.subr.bf16.mxu0 0
        %2361 = vmatpush1.bf16.msra.mxu0 0
        %2362 = vmatprep.subr.bf16.mxu0 0
        %2363 = vmatpush1.bf16.msra.mxu0 0
        %2364 = vmatprep.subr.bf16.mxu0 0
        %2365 = vmatpush1.bf16.msra.mxu0 %v2339
        %2366 = vmatprep.subr.bf16.mxu0 0
        %2367 = vmatpush1.bf16.msra.mxu0 %v2338
        %2368 = vmatprep.subr.bf16.mxu0 0
        %2369 = vmatpush1.bf16.msra.mxu0 %v2337
        %2370 = vmatprep.subr.bf16.mxu0 0
        %2371 = vmatpush1.bf16.msra.mxu0 %v2336
        %2372 = vmatprep.subr.bf16.mxu0 0
        %2373 = vmatpush2.bf16.msra.mxu0 0
        %2374 = vmatprep.subr.bf16.mxu0 0
        %2375 = vmatpush2.bf16.msra.mxu0 0
        %2376 = vmatprep.subr.bf16.mxu0 0
        %2377 = vmatpush2.bf16.msra.mxu0 0
        %2378 = vmatprep.subr.bf16.mxu0 0
        %2379 = vmatpush2.bf16.msra.mxu0 0
        %2380 = vmatprep.subr.bf16.mxu0 0
        %2381 = vmatpush2.bf16.msra.mxu0 0
        %2382 = vmatprep.subr.bf16.mxu0 0
        %2383 = vmatpush2.bf16.msra.mxu0 0
        %2384 = vmatprep.subr.bf16.mxu0 0
        %2385 = vmatpush2.bf16.msra.mxu0 0
        %2386 = vmatprep.subr.bf16.mxu0 0
        %2387 = vmatpush2.bf16.msra.mxu0 0
        %2388 = vmatprep.mubr.bf16.mxu0 0
        %2389 = vmatmul.mubr.bf16.gmra.mxu0 %v2345
        %v2390 = vpop.f32.mrf.mxu0
        %v2391 = vadd.f32 0.0, %v2390
        %v2392 = vpop.f32.mrf.mxu0
        %v2393 = vpop.f32.mrf.mxu0
        %v2394 = vadd.f32 0.0, %v2393
        %v2395 = vpop.f32.mrf.mxu0
        %2396 = vmatprep.mubr.bf16.mxu0 0
        %2397 = vmatmul.mubr.bf16.gmra.mxu0 %v2348
        %v2398 = vpop.f32.mrf.mxu0
        %v2399 = vadd.f32 0.0, %v2398
        %v2400 = vpop.f32.mrf.mxu0
        %v2401 = vpop.f32.mrf.mxu0
        %v2402 = vadd.f32 0.0, %v2401
        %v2403 = vpop.f32.mrf.mxu0
        %2404 = vmatprep.mubr.bf16.mxu0 0
        %2405 = vmatmul.mubr.bf16.gmra.mxu0 %v2351
        %v2406 = vpop.f32.mrf.mxu0
        %v2407 = vadd.f32 0.0, %v2406
        %v2408 = vpop.f32.mrf.mxu0
        %v2409 = vpop.f32.mrf.mxu0
        %v2410 = vadd.f32 0.0, %v2409
        %v2411 = vpop.f32.mrf.mxu0
        %2412 = vmatprep.mubr.bf16.mxu0 0
        %2413 = vmatmul.mubr.bf16.gmra.mxu0 %v2354
        %v2414 = vpop.f32.mrf.mxu0
        %v2415 = vadd.f32 0.0, %v2414
        %v2416 = vpop.f32.mrf.mxu0
        %v2417 = vpop.f32.mrf.mxu0
        %v2418 = vadd.f32 0.0, %v2417
        %v2419 = vpop.f32.mrf.mxu0
        %2420 = vdwg.mxu0
        %v2429 = vunpack.c.l.b16 %v2288
        %v2430 = vunpack.c.l.b16 %v2289
        %v2431 = vunpack.c.l.b16 %v2290
        %v2432 = vunpack.c.l.b16 %v2291
        %v2433 = vunpack.c.l.b16 %v2292
        %v2434 = vunpack.c.l.b16 %v2293
        %v2435 = vunpack.c.l.b16 %v2294
        %v2436 = vunpack.c.l.b16 %v2295
        %v2437 = vpack.c.b16 %v2430, %v2429
        %v2438 = vpack.c.b16 %v2432, %v2431
        %v2439 = vpack.c.b16 %v2434, %v2433
        %v2440 = vpack.c.b16 %v2436, %v2435
        %v2446 = vsel %vm868, %v813, 0
        %v2449 = vsel %vm868, %v814, 0
        %v2452 = vsel %vm868, %v815, 0
        %v2455 = vsel %vm868, %v816, 0
        %2457 = vmatprep.subr.bf16.mxu0 0
        %2458 = vmatpush1.bf16.msra.mxu0 0
        %2459 = vmatprep.subr.bf16.mxu0 0
        %2460 = vmatpush1.bf16.msra.mxu0 0
        %2461 = vmatprep.subr.bf16.mxu0 0
        %2462 = vmatpush1.bf16.msra.mxu0 0
        %2463 = vmatprep.subr.bf16.mxu0 0
        %2464 = vmatpush1.bf16.msra.mxu0 0
        %2465 = vmatprep.subr.bf16.mxu0 0
        %2466 = vmatpush1.bf16.msra.mxu0 %v2440
        %2467 = vmatprep.subr.bf16.mxu0 0
        %2468 = vmatpush1.bf16.msra.mxu0 %v2439
        %2469 = vmatprep.subr.bf16.mxu0 0
        %2470 = vmatpush1.bf16.msra.mxu0 %v2438
        %2471 = vmatprep.subr.bf16.mxu0 0
        %2472 = vmatpush1.bf16.msra.mxu0 %v2437
        %2473 = vmatprep.subr.bf16.mxu0 0
        %2474 = vmatpush2.bf16.msra.mxu0 0
        %2475 = vmatprep.subr.bf16.mxu0 0
        %2476 = vmatpush2.bf16.msra.mxu0 0
        %2477 = vmatprep.subr.bf16.mxu0 0
        %2478 = vmatpush2.bf16.msra.mxu0 0
        %2479 = vmatprep.subr.bf16.mxu0 0
        %2480 = vmatpush2.bf16.msra.mxu0 0
        %2481 = vmatprep.subr.bf16.mxu0 0
        %2482 = vmatpush2.bf16.msra.mxu0 0
        %2483 = vmatprep.subr.bf16.mxu0 0
        %2484 = vmatpush2.bf16.msra.mxu0 0
        %2485 = vmatprep.subr.bf16.mxu0 0
        %2486 = vmatpush2.bf16.msra.mxu0 0
        %2487 = vmatprep.subr.bf16.mxu0 0
        %2488 = vmatpush2.bf16.msra.mxu0 0
        %2489 = vmatprep.mubr.bf16.mxu0 0
        %2490 = vmatmul.mubr.bf16.gmra.mxu0 %v2446
        %v2491 = vpop.f32.mrf.mxu0
        %v2492 = vadd.f32 %v2391, %v2491
        %v2493 = vpop.f32.mrf.mxu0
        %v2494 = vpop.f32.mrf.mxu0
        %v2495 = vadd.f32 %v2394, %v2494
        %v2496 = vpop.f32.mrf.mxu0
        %2497 = vmatprep.mubr.bf16.mxu0 0
        %2498 = vmatmul.mubr.bf16.gmra.mxu0 %v2449
        %v2499 = vpop.f32.mrf.mxu0
        %v2500 = vadd.f32 %v2399, %v2499
        %v2501 = vpop.f32.mrf.mxu0
        %v2502 = vpop.f32.mrf.mxu0
        %v2503 = vadd.f32 %v2402, %v2502
        %v2504 = vpop.f32.mrf.mxu0
        %2505 = vmatprep.mubr.bf16.mxu0 0
        %2506 = vmatmul.mubr.bf16.gmra.mxu0 %v2452
        %v2507 = vpop.f32.mrf.mxu0
        %v2508 = vadd.f32 %v2407, %v2507
        %v2509 = vpop.f32.mrf.mxu0
        %v2510 = vpop.f32.mrf.mxu0
        %v2511 = vadd.f32 %v2410, %v2510
        %v2512 = vpop.f32.mrf.mxu0
        %2513 = vmatprep.mubr.bf16.mxu0 0
        %2514 = vmatmul.mubr.bf16.gmra.mxu0 %v2455
        %v2515 = vpop.f32.mrf.mxu0
        %v2516 = vadd.f32 %v2415, %v2515
        %v2517 = vpop.f32.mrf.mxu0
        %v2518 = vpop.f32.mrf.mxu0
        %v2519 = vadd.f32 %v2418, %v2518
        %v2520 = vpop.f32.mrf.mxu0
        %2521 = vdwg.mxu0
        %v2522 = vld [vmem:[%s15] sm:$0x1]
        %v2524 = vlaneseq
        %v2525 = vshrl.u32 %v2524, 7
        %v2526 = vsub.s32 0, %v2525
        %v2527 = vrot.slane %v2522, %v2526
        %v2529 = vadd.f32 %v2492, %v2527
        %v2530 = vadd.f32 %v2495, %v2527
        %v2531 = vadd.f32 %v2500, %v2527
        %v2532 = vadd.f32 %v2503, %v2527
        %v2533 = vadd.f32 %v2508, %v2527
        %v2534 = vadd.f32 %v2511, %v2527
        %v2535 = vadd.f32 %v2516, %v2527
        %v2536 = vadd.f32 %v2519, %v2527
        %v2537 = vxor.u32 %v2529, 2147483648
        %v2538 = vxor.u32 %v2530, 2147483648
        %v2539 = vxor.u32 %v2531, 2147483648
        %v2540 = vxor.u32 %v2532, 2147483648
        %v2541 = vxor.u32 %v2533, 2147483648
        %v2542 = vxor.u32 %v2534, 2147483648
        %v2543 = vxor.u32 %v2535, 2147483648
        %v2544 = vxor.u32 %v2536, 2147483648
        %v2545 = vmul.f32 %v2537, 1.442695
        %v2546 = vpow.pop %v2545
        %v2547 = vmul.f32 %v2538, 1.442695
        %v2548 = vpow.pop %v2547
        %v2549 = vmul.f32 %v2539, 1.442695
        %v2550 = vpow.pop %v2549
        %v2551 = vmul.f32 %v2540, 1.442695
        %v2552 = vpow.pop %v2551
        %v2553 = vmul.f32 %v2541, 1.442695
        %v2554 = vpow.pop %v2553
        %v2555 = vmul.f32 %v2542, 1.442695
        %v2556 = vpow.pop %v2555
        %v2557 = vmul.f32 %v2543, 1.442695
        %v2558 = vpow.pop %v2557
        %v2559 = vmul.f32 %v2544, 1.442695
        %v2560 = vpow.pop %v2559
        %v2561 = vadd.f32 %v2546, 1.0
        %v2562 = vadd.f32 %v2548, 1.0
        %v2563 = vadd.f32 %v2550, 1.0
        %v2564 = vadd.f32 %v2552, 1.0
        %v2565 = vadd.f32 %v2554, 1.0
        %v2566 = vadd.f32 %v2556, 1.0
        %v2567 = vadd.f32 %v2558, 1.0
        %v2568 = vadd.f32 %v2560, 1.0
        %v2569 = vrcp.pop %v2561
        %v2570 = vmul.f32 1.0, %v2569
        %v2571 = vrcp.pop %v2562
        %v2572 = vmul.f32 1.0, %v2571
        %v2573 = vrcp.pop %v2563
        %v2574 = vmul.f32 1.0, %v2573
        %v2575 = vrcp.pop %v2564
        %v2576 = vmul.f32 1.0, %v2575
        %v2577 = vrcp.pop %v2565
        %v2578 = vmul.f32 1.0, %v2577
        %v2579 = vrcp.pop %v2566
        %v2580 = vmul.f32 1.0, %v2579
        %v2581 = vrcp.pop %v2567
        %v2582 = vmul.f32 1.0, %v2581
        %v2583 = vrcp.pop %v2568
        %v2584 = vmul.f32 1.0, %v2583
        %v2585 = vmul.f32 %v2529, %v2570
        %v2586 = vmul.f32 %v2530, %v2572
        %v2587 = vmul.f32 %v2531, %v2574
        %v2588 = vmul.f32 %v2532, %v2576
        %v2589 = vmul.f32 %v2533, %v2578
        %v2590 = vmul.f32 %v2534, %v2580
        %v2591 = vmul.f32 %v2535, %v2582
        %v2592 = vmul.f32 %v2536, %v2584
        %2593 = vst [vmem:[%s602] sm:$0xff] %v2585
        %2594 = vst [vmem:[%s602 + $0x8] sm:$0xff] %v2586
        %2595 = vst [vmem:[%s602 + $0x10] sm:$0xff] %v2587
        %2596 = vst [vmem:[%s602 + $0x18] sm:$0xff] %v2588
        %2597 = vst [vmem:[%s602 + $0x20] sm:$0xff] %v2589
        %2598 = vst [vmem:[%s602 + $0x28] sm:$0xff] %v2590
        %2599 = vst [vmem:[%s602 + $0x30] sm:$0xff] %v2591
        %2600 = vst [vmem:[%s602 + $0x38] sm:$0xff] %v2592
        %s2601 = sand.u32 %s383, 1
        %s2602 = scalar_lea.sflag [#allocation4], %s2601
        %s2603 = sand.u32 %s383, 1
        %s2604 = smul.addr %s2603, 64
        %s2605 = scalar_lea.vmem [#allocation13], %s2604
        // Predicated region
        $region109: #{tpu_custom_call.1} parent=83 // pred_check
          %p2606 = pneg %p393
        $region110: #{tpu_custom_call.1} parent=83 // pred_check_branch
          %2608 = sbr.rel (%p2606) target = $region112
        $region111: #{tpu_custom_call.1} parent=83 // pred_region
          %s2610 = ssub.s32 1024, 1024
          %2611 = vsyncadd %s2602, %s2610
          %s2612 = smul.addr %s34, 8
          %s2613 = smul.addr %s2612, 128
          %s2614 = scalar_lea.hbm %s16, %s2613
          %s2615 = sshll.u32 %s2605, 4
          %s2616 = int_to_ptr.vmem [resolvable:$true] %s2615
          %2621 = dma.vmem_to_hbm [thread:$0]  %s2616, 1024, %s2614, %s2602, 128, 128, 8
        $region112: #{tpu_custom_call.1} parent=83 // pred_fallthru
          _
      $region84: #{tpu_custom_call.1} parent=5 // pred_fallthru
        _
      %p2622 = scmp.le.s32.totalorder 2, %s29
      // Predicated region
      $region113: #{tpu_custom_call.1} parent=5 // pred_check
        %p2623 = pneg %p2622
      $region114: #{tpu_custom_call.1} parent=5 // pred_check_branch
        %2625 = sbr.rel (%p2623) target = $region116
      $region115: #{tpu_custom_call.1} parent=5 // pred_region
        %s2626 = ssub.s32 %s29, 2
        // Predicated region
        $region117: #{tpu_custom_call.1} parent=115 // pred_check
          %p2627 = pneg %p399
        $region118: #{tpu_custom_call.1} parent=115 // pred_check_branch
          %2629 = sbr.rel (%p2627) target = $region120
        $region119: #{tpu_custom_call.1} parent=115 // pred_region
          %s2630 = sand.u32 %s384, 1
          %s2631 = scalar_lea.sflag [#allocation4], %s2630
          %s2632 = sand.u32 %s384, 1
          %s2633 = smul.addr %s2632, 64
          %s2634 = scalar_lea.vmem [#allocation13], %s2633
          %2635 = dma.done %s2631, 1024
        $region120: #{tpu_custom_call.1} parent=115 // pred_fallthru
          _
      $region116: #{tpu_custom_call.1} parent=5 // pred_fallthru
        _
    $region6: #{tpu_custom_call.1} parent=1 // loop_footer
      %s33 = sadd.s32 1, %s29
    $region7: #{tpu_custom_call.1} parent=1 // loop_footer_branch
      %28 = sbr.rel target = $region3
    $region8: #{tpu_custom_call.1} parent=1 // loop_exit
      _
    %2636 = vsyncpa [#allocation3], 1
    %s2637 = scalar_lea.sflag [#allocation3], 1
    %2638 = vsyncpa %s2637, 1
    %2639 = vsyncpa [#allocation6], 1
    %2640 = vsyncpa [#allocation9], 1
    %2641 = vsyncpa [#allocation12], 1
    %2642 = vsyncpa [#allocation4], 1
    %s2643 = scalar_lea.sflag [#allocation4], 1
    %2644 = vsyncpa %s2643, 1

</llo_original>
